<compile_context>
chip_gen: v7x
topology: tpu7x:2x2x1
jax: 0.10.0
libtpu: 0.0.40
codegen_flags: <defaults>
</compile_context>

<pallas_src>
import functools

import jax
import jax.numpy as jnp
from jax import lax
from jax.experimental import pallas as pl
from jax.experimental.pallas import tpu as pltpu


def _adaptive_temp_kernel(z_i_ref, z_j_ref, w1_ref, b1_ref, w2t_ref, b2_ref,
                          sims_ref, reg_ref, *, num_heads, feat_dim,
                          lower, upper, beta):
    B = z_i_ref.shape[1]
    D = feat_dim
    eps_sq = jnp.float32(1e-8 * 1e-8)   # PyTorch clamps the product of norms
    scale = jnp.float32(upper - lower)
    reg_total = jnp.float32(0.0)

    # H is a tiny compile-time constant -> static unrolled loop (full LLO
    # scheduling visibility, static indexing into the VMEM refs).
    # TODO(synk): if H grows past ~8, move heads onto a "parallel" grid axis
    # (2x on v7x megacore) instead of full unrolling.
    for h in range(num_heads):
        zi = z_i_ref[h].astype(jnp.float32)                            # (B, D)
        zj = z_j_ref[h].astype(jnp.float32)                            # (B, D)

        # --- cosine similarity along feature dim (torch dim=1, eps=1e-8) ---
        # dot * rsqrt(clamp(||zi||^2 * ||zj||^2, eps^2)) : rsqrt rides the EUP.
        dot = jnp.sum(zi * zj, axis=1, keepdims=True)                  # (B, 1)
        sq_i = jnp.sum(zi * zi, axis=1, keepdims=True)                 # (B, 1)
        sq_j = jnp.sum(zj * zj, axis=1, keepdims=True)                 # (B, 1)
        sim = dot * lax.rsqrt(jnp.maximum(sq_i * sq_j, eps_sq))        # (B, 1)

        # --- Linear(2D -> 128): two K=D MXU dots on tile-aligned W1 halves ---
        # (equivalent to dot(cat[zi, zj], W1) without the lane-shuffle concat)
        w1h = w1_ref[h]                                                # (2D, 128)
        hidden = (jnp.dot(zi, w1h[:D], preferred_element_type=jnp.float32)
                  + jnp.dot(zj, w1h[D:], preferred_element_type=jnp.float32))
        hidden = jnp.maximum(hidden + b1_ref[h], 0.0)                  # ReLU

        # --- Linear(128 -> 1) as VPU multiply + lane reduction (no N=1 MXU) ---
        logit = (jnp.sum(hidden * w2t_ref[h], axis=1, keepdims=True)
                 + b2_ref[h])                                          # (B, 1)
        logit = jnp.clip(logit, -10.0, 10.0)

        temp = jax.nn.sigmoid(logit) * scale + lower                   # (B, 1)
        # EUP approx reciprocal + one Newton step (error ~2^-24, keeps 1e-4
        # check); reused for both the sims scaling and the reg term.
        inv_temp = pl.reciprocal(temp, approx=True)
        inv_temp = inv_temp * (2.0 - temp * inv_temp)

        # --- PyTorch broadcasting quirk: sim (B,) / temp (B,1) -> (B, B) ---
        # scaled[i, j] = sim[j] / temp[i]
        sim_row = jnp.reshape(sim, (1, B))                             # (1, B)
        sims_ref[h] = sim_row * inv_temp                               # (B, B)
        # TODO(synk): sims last dim is B=8 (lane-sparse masked stores); only
        # worth re-laying out (or returning the rank-1 factors) if B grows.

        # --- reg: beta * mean(size(1)/2 * log(temp) + 1/temp) ---
        reg_total = reg_total + beta * jnp.mean(
            (B / 2.0) * jnp.log(temp) + inv_temp)

    reg_ref[0] = reg_total


def adaptive_temperature_forward(z_i, z_j, w1, b1, w2, b2,
                                 *, lower_limit=1e-5, upper_limit=2.0, beta=0.1):
    """z_i, z_j: (H, B, D). Returns (stacked (H, B, B) scaled sims, total_reg)."""
    H, B, D = z_i.shape
    assert w1.shape == (H, 2 * D, 128)
    assert b1.shape == (H, 1, 128)
    assert w2.shape == (H, 128, 1)
    assert b2.shape == (H, 1, 1)

    # Lane-dense W2 rows (a (128,1) column would pad to a full (128,128) tile);
    # reshape of a (128,1) column to (1,128) is exactly its transpose.
    w2t = w2.reshape(H, 1, 128)
    # b2 scalars go through SMEM (no padded (1,1) VMEM tiles).
    b2s = b2.reshape(H)

    kernel = functools.partial(_adaptive_temp_kernel, num_heads=H, feat_dim=D,
                               lower=lower_limit, upper=upper_limit, beta=beta)

    # TODO(synk): at larger B, tile the (H,B,B) sims output over a grid and set
    # vmem_limit_bytes explicitly (v7x has only 32 MiB scoped / 64 MiB VMEM).
    sims, reg = pl.pallas_call(
        kernel,
        out_shape=(
            jax.ShapeDtypeStruct((H, B, B), jnp.float32),
            jax.ShapeDtypeStruct((1,), jnp.float32),
        ),
        in_specs=[
            pl.BlockSpec(memory_space=pltpu.MemorySpace.VMEM),   # z_i  (H,B,D)
            pl.BlockSpec(memory_space=pltpu.MemorySpace.VMEM),   # z_j  (H,B,D)
            pl.BlockSpec(memory_space=pltpu.MemorySpace.VMEM),   # W1   (H,2D,128)
            pl.BlockSpec(memory_space=pltpu.MemorySpace.VMEM),   # b1   (H,1,128)
            pl.BlockSpec(memory_space=pltpu.MemorySpace.VMEM),   # W2^T (H,1,128)
            pl.BlockSpec(memory_space=pltpu.MemorySpace.SMEM),   # b2   (H,)
        ],
        out_specs=(
            pl.BlockSpec(memory_space=pltpu.MemorySpace.VMEM),   # sims (H,B,B)
            pl.BlockSpec(memory_space=pltpu.MemorySpace.SMEM),   # total reg (1,)
        ),
    )(z_i, z_j, w1, b1, w2t, b2s)

    return sims, reg[0]


def _reference(z_i, z_j, w1, b1, w2, b2, lower=1e-5, upper=2.0, beta=0.1):
    """Pure-JAX reference mirroring the PyTorch forward (ATen cosine_similarity
    clamps the *product* of squared norms at eps^2)."""
    H, B, D = z_i.shape
    sims_out, total_reg = [], 0.0
    for h in range(H):
        zi, zj = z_i[h], z_j[h]
        dot = jnp.sum(zi * zj, axis=1)
        sq_i = jnp.sum(zi * zi, axis=1)
        sq_j = jnp.sum(zj * zj, axis=1)
        sim = dot / jnp.sqrt(jnp.maximum(sq_i * sq_j, 1e-8 ** 2))     # (B,)
        cat = jnp.concatenate([zi, zj], axis=-1)                      # (B, 2D)
        hdn = jnp.maximum(cat @ w1[h] + b1[h, 0], 0.0)                # (B, 128)
        logit = jnp.clip(hdn @ w2[h] + b2[h, 0], -10.0, 10.0)         # (B, 1)
        temp = jax.nn.sigmoid(logit) * (upper - lower) + lower        # (B, 1)
        scaled = sim / temp                                           # (B, B)
        sims_out.append(scaled)
        total_reg = total_reg + beta * jnp.mean(
            (scaled.shape[1] / 2.0) * jnp.log(temp) + 1.0 / temp)
    return sims_out, total_reg


if __name__ == "__main__":
    H, B, D = 3, 8, 32
    key = jax.random.PRNGKey(0)
    k_zi, k_zj, k_w1, k_b1, k_w2, k_b2 = jax.random.split(key, 6)

    # Inputs (one (B, D) feature block per head, stacked on leading axis).
    z_i = jax.random.normal(k_zi, (H, B, D), dtype=jnp.float32)
    z_j = jax.random.normal(k_zj, (H, B, D), dtype=jnp.float32)

    # Deterministic synthetic MLP parameters (shapes match nn.Linear(2D,128)/(128,1)).
    w1 = jax.random.normal(k_w1, (H, 2 * D, 128), dtype=jnp.float32) * (1.0 / jnp.sqrt(2.0 * D))
    b1 = jax.random.normal(k_b1, (H, 1, 128), dtype=jnp.float32) * 0.01
    w2 = jax.random.normal(k_w2, (H, 128, 1), dtype=jnp.float32) * (1.0 / jnp.sqrt(128.0))
    b2 = jax.random.normal(k_b2, (H, 1, 1), dtype=jnp.float32) * 0.01
    # TODO(synk): `temperature_heads` ParameterList is unused in the PyTorch
    # forward, so it is intentionally omitted here.

    scaled_sims, total_reg = adaptive_temperature_forward(
        z_i, z_j, w1, b1, w2, b2, lower_limit=1e-5, upper_limit=2.0, beta=0.1)
    jax.block_until_ready(scaled_sims)
    jax.block_until_ready(total_reg)

    # Self-check against a pure-JAX reference of the PyTorch semantics.
    ref_sims, ref_reg = _reference(z_i, z_j, w1, b1, w2, b2)
    assert scaled_sims.shape == (H, B, B)
    for h in range(H):
        assert jnp.allclose(scaled_sims[h], ref_sims[h], rtol=1e-4, atol=1e-4)
    assert jnp.allclose(total_reg, ref_reg, rtol=1e-4, atol=1e-4)

    print("KERNEL_OK")
</pallas_src>

<mosaic_0001>
module attributes {stable_mosaic.version = 11 : i64} {
  func.func @_adaptive_temp_kernel(%arg0: memref<3x8x32xf32, #tpu.memory_space<vmem>>, %arg1: memref<3x8x32xf32, #tpu.memory_space<vmem>>, %arg2: memref<3x64x128xf32, #tpu.memory_space<vmem>>, %arg3: memref<3x1x128xf32, #tpu.memory_space<vmem>>, %arg4: memref<3x1x128xf32, #tpu.memory_space<vmem>>, %arg5: memref<3xf32, #tpu.memory_space<smem>>, %arg6: memref<3x8x8xf32, #tpu.memory_space<vmem>>, %arg7: memref<1xf32, #tpu.memory_space<smem>>) attributes {dimension_semantics = [], scalar_prefetch = 0 : i64, scratch_operands = 0 : i64, tpu.core_type = #tpu.core_type<tc>} {
    %c0 = arith.constant 0 : index
    %c0_0 = arith.constant 0 : index
    %c0_1 = arith.constant 0 : index
    %0 = vector.load %arg0[%c0, %c0_0, %c0_1] : memref<3x8x32xf32, #tpu.memory_space<vmem>>, vector<1x8x32xf32>
    %1 = vector.shape_cast %0 : vector<1x8x32xf32> to vector<8x32xf32>
    %c0_2 = arith.constant 0 : index
    %c0_3 = arith.constant 0 : index
    %c0_4 = arith.constant 0 : index
    %2 = vector.load %arg1[%c0_2, %c0_3, %c0_4] : memref<3x8x32xf32, #tpu.memory_space<vmem>>, vector<1x8x32xf32>
    %3 = vector.shape_cast %2 : vector<1x8x32xf32> to vector<8x32xf32>
    %4 = arith.mulf %1, %3 : vector<8x32xf32>
    %cst = arith.constant dense<0.000000e+00> : vector<8xf32>
    %5 = vector.multi_reduction <add>, %4, %cst [1] : vector<8x32xf32> to vector<8xf32>
    %6 = vector.shape_cast %5 : vector<8xf32> to vector<8x1xf32>
    %7 = arith.mulf %1, %1 : vector<8x32xf32>
    %cst_5 = arith.constant dense<0.000000e+00> : vector<8xf32>
    %8 = vector.multi_reduction <add>, %7, %cst_5 [1] : vector<8x32xf32> to vector<8xf32>
    %9 = vector.shape_cast %8 : vector<8xf32> to vector<8x1xf32>
    %10 = arith.mulf %3, %3 : vector<8x32xf32>
    %cst_6 = arith.constant dense<0.000000e+00> : vector<8xf32>
    %11 = vector.multi_reduction <add>, %10, %cst_6 [1] : vector<8x32xf32> to vector<8xf32>
    %12 = vector.shape_cast %11 : vector<8xf32> to vector<8x1xf32>
    %13 = arith.mulf %9, %12 : vector<8x1xf32>
    %cst_7 = arith.constant 1.000000e-16 : f32
    %14 = vector.broadcast %cst_7 : f32 to vector<8x1xf32>
    %15 = arith.maximumf %13, %14 : vector<8x1xf32>
    %16 = math.rsqrt %15 : vector<8x1xf32>
    %17 = arith.mulf %6, %16 : vector<8x1xf32>
    %c0_8 = arith.constant 0 : index
    %c0_9 = arith.constant 0 : index
    %c0_10 = arith.constant 0 : index
    %18 = vector.load %arg2[%c0_8, %c0_9, %c0_10] : memref<3x64x128xf32, #tpu.memory_space<vmem>>, vector<1x64x128xf32>
    %19 = vector.shape_cast %18 : vector<1x64x128xf32> to vector<64x128xf32>
    %20 = vector.extract_strided_slice %19 {offsets = [0, 0], sizes = [32, 128], strides = [1, 1]} : vector<64x128xf32> to vector<32x128xf32>
    %cst_11 = arith.constant dense<0.000000e+00> : vector<8x128xf32>
    %21 = tpu.matmul %1, %20, %cst_11 {dimension_numbers = #tpu.dot_dimension_numbers<[1], [0], [0], [1], [0, 0, 1, 1], [], []>} : vector<8x32xf32>, vector<32x128xf32>, vector<8x128xf32> -> vector<8x128xf32>
    %22 = vector.extract_strided_slice %19 {offsets = [32, 0], sizes = [32, 128], strides = [1, 1]} : vector<64x128xf32> to vector<32x128xf32>
    %cst_12 = arith.constant dense<0.000000e+00> : vector<8x128xf32>
    %23 = tpu.matmul %3, %22, %cst_12 {dimension_numbers = #tpu.dot_dimension_numbers<[1], [0], [0], [1], [0, 0, 1, 1], [], []>} : vector<8x32xf32>, vector<32x128xf32>, vector<8x128xf32> -> vector<8x128xf32>
    %24 = arith.addf %21, %23 : vector<8x128xf32>
    %c0_13 = arith.constant 0 : index
    %c0_14 = arith.constant 0 : index
    %c0_15 = arith.constant 0 : index
    %25 = vector.load %arg3[%c0_13, %c0_14, %c0_15] : memref<3x1x128xf32, #tpu.memory_space<vmem>>, vector<1x1x128xf32>
    %26 = vector.shape_cast %25 : vector<1x1x128xf32> to vector<1x128xf32>
    %27 = vector.broadcast %26 : vector<1x128xf32> to vector<8x128xf32>
    %28 = arith.addf %24, %27 : vector<8x128xf32>
    %cst_16 = arith.constant 0.000000e+00 : f32
    %29 = vector.broadcast %cst_16 : f32 to vector<8x128xf32>
    %30 = arith.maximumf %28, %29 : vector<8x128xf32>
    %c0_17 = arith.constant 0 : index
    %c0_18 = arith.constant 0 : index
    %c0_19 = arith.constant 0 : index
    %31 = vector.load %arg4[%c0_17, %c0_18, %c0_19] : memref<3x1x128xf32, #tpu.memory_space<vmem>>, vector<1x1x128xf32>
    %32 = vector.shape_cast %31 : vector<1x1x128xf32> to vector<1x128xf32>
    %33 = vector.broadcast %32 : vector<1x128xf32> to vector<8x128xf32>
    %34 = arith.mulf %30, %33 : vector<8x128xf32>
    %cst_20 = arith.constant dense<0.000000e+00> : vector<8xf32>
    %35 = vector.multi_reduction <add>, %34, %cst_20 [1] : vector<8x128xf32> to vector<8xf32>
    %36 = vector.shape_cast %35 : vector<8xf32> to vector<8x1xf32>
    %c0_21 = arith.constant 0 : index
    %37 = memref.load %arg5[%c0_21] : memref<3xf32, #tpu.memory_space<smem>>
    %38 = vector.broadcast %37 : f32 to vector<8x1xf32>
    %39 = arith.addf %36, %38 : vector<8x1xf32>
    %cst_22 = arith.constant -1.000000e+01 : f32
    %cst_23 = arith.constant 1.000000e+01 : f32
    %40 = vector.broadcast %cst_22 : f32 to vector<8x1xf32>
    %41 = arith.maximumf %40, %39 : vector<8x1xf32>
    %42 = vector.broadcast %cst_23 : f32 to vector<8x1xf32>
    %43 = arith.minimumf %42, %41 : vector<8x1xf32>
    %44 = arith.negf %43 : vector<8x1xf32>
    %45 = math.exp %44 : vector<8x1xf32>
    %cst_24 = arith.constant 1.000000e+00 : f32
    %46 = vector.broadcast %cst_24 : f32 to vector<8x1xf32>
    %47 = arith.addf %46, %45 : vector<8x1xf32>
    %48 = arith.divf %46, %47 : vector<8x1xf32>
    %cst_25 = arith.constant 1.999990e+00 : f32
    %49 = vector.broadcast %cst_25 : f32 to vector<8x1xf32>
    %50 = arith.mulf %48, %49 : vector<8x1xf32>
    %cst_26 = arith.constant 9.99999974E-6 : f32
    %51 = vector.broadcast %cst_26 : f32 to vector<8x1xf32>
    %52 = arith.addf %50, %51 : vector<8x1xf32>
    %53 = tpu.reciprocal %52 {approx = true} : vector<8x1xf32> -> vector<8x1xf32>
    %54 = arith.mulf %52, %53 : vector<8x1xf32>
    %cst_27 = arith.constant 2.000000e+00 : f32
    %55 = vector.broadcast %cst_27 : f32 to vector<8x1xf32>
    %56 = arith.subf %55, %54 : vector<8x1xf32>
    %57 = arith.mulf %53, %56 : vector<8x1xf32>
    %58 = vector.shape_cast %17 : vector<8x1xf32> to vector<1x8xf32>
    %59 = vector.broadcast %58 : vector<1x8xf32> to vector<8x8xf32>
    %60 = vector.broadcast %57 : vector<8x1xf32> to vector<8x8xf32>
    %61 = arith.mulf %59, %60 : vector<8x8xf32>
    %c0_28 = arith.constant 0 : index
    %c0_29 = arith.constant 0 : index
    %c0_30 = arith.constant 0 : index
    %62 = vector.load %arg6[%c0_28, %c0_29, %c0_30] : memref<3x8x8xf32, #tpu.memory_space<vmem>>, vector<1x8x8xf32>
    %63 = vector.shape_cast %62 : vector<1x8x8xf32> to vector<8x8xf32>
    %64 = vector.shape_cast %61 : vector<8x8xf32> to vector<1x8x8xf32>
    tpu.vector_store %arg6[%c0_28, %c0_29, %c0_30], %64 {strides = array<i32>} : memref<3x8x8xf32, #tpu.memory_space<vmem>>, vector<1x8x8xf32>,
    %65 = math.log %52 : vector<8x1xf32>
    %cst_31 = arith.constant 4.000000e+00 : f32
    %66 = vector.broadcast %cst_31 : f32 to vector<8x1xf32>
    %67 = arith.mulf %66, %65 : vector<8x1xf32>
    %68 = arith.addf %67, %57 : vector<8x1xf32>
    %69 = vector.shape_cast %68 : vector<8x1xf32> to vector<1x8x1xf32>
    %cst_32 = arith.constant dense<0.000000e+00> : vector<1xf32>
    %70 = vector.multi_reduction <add>, %69, %cst_32 [1, 2] : vector<1x8x1xf32> to vector<1xf32>
    %71 = vector.shape_cast %70 : vector<1xf32> to vector<1x1x1xf32>
    %72 = vector.extract %71[0, 0, 0] : f32 from vector<1x1x1xf32>
    %cst_33 = arith.constant 8.000000e+00 : f32
    %73 = arith.divf %72, %cst_33 : f32
    %cst_34 = arith.constant 1.000000e-01 : f32
    %74 = arith.mulf %cst_34, %73 : f32
    %cst_35 = arith.constant 0.000000e+00 : f32
    %75 = arith.addf %cst_35, %74 : f32
    %c1 = arith.constant 1 : index
    %c0_36 = arith.constant 0 : index
    %c0_37 = arith.constant 0 : index
    %76 = vector.load %arg0[%c1, %c0_36, %c0_37] : memref<3x8x32xf32, #tpu.memory_space<vmem>>, vector<1x8x32xf32>
    %77 = vector.shape_cast %76 : vector<1x8x32xf32> to vector<8x32xf32>
    %c1_38 = arith.constant 1 : index
    %c0_39 = arith.constant 0 : index
    %c0_40 = arith.constant 0 : index
    %78 = vector.load %arg1[%c1_38, %c0_39, %c0_40] : memref<3x8x32xf32, #tpu.memory_space<vmem>>, vector<1x8x32xf32>
    %79 = vector.shape_cast %78 : vector<1x8x32xf32> to vector<8x32xf32>
    %80 = arith.mulf %77, %79 : vector<8x32xf32>
    %cst_41 = arith.constant dense<0.000000e+00> : vector<8xf32>
    %81 = vector.multi_reduction <add>, %80, %cst_41 [1] : vector<8x32xf32> to vector<8xf32>
    %82 = vector.shape_cast %81 : vector<8xf32> to vector<8x1xf32>
    %83 = arith.mulf %77, %77 : vector<8x32xf32>
    %cst_42 = arith.constant dense<0.000000e+00> : vector<8xf32>
    %84 = vector.multi_reduction <add>, %83, %cst_42 [1] : vector<8x32xf32> to vector<8xf32>
    %85 = vector.shape_cast %84 : vector<8xf32> to vector<8x1xf32>
    %86 = arith.mulf %79, %79 : vector<8x32xf32>
    %cst_43 = arith.constant dense<0.000000e+00> : vector<8xf32>
    %87 = vector.multi_reduction <add>, %86, %cst_43 [1] : vector<8x32xf32> to vector<8xf32>
    %88 = vector.shape_cast %87 : vector<8xf32> to vector<8x1xf32>
    %89 = arith.mulf %85, %88 : vector<8x1xf32>
    %cst_44 = arith.constant 1.000000e-16 : f32
    %90 = vector.broadcast %cst_44 : f32 to vector<8x1xf32>
    %91 = arith.maximumf %89, %90 : vector<8x1xf32>
    %92 = math.rsqrt %91 : vector<8x1xf32>
    %93 = arith.mulf %82, %92 : vector<8x1xf32>
    %c1_45 = arith.constant 1 : index
    %c0_46 = arith.constant 0 : index
    %c0_47 = arith.constant 0 : index
    %94 = vector.load %arg2[%c1_45, %c0_46, %c0_47] : memref<3x64x128xf32, #tpu.memory_space<vmem>>, vector<1x64x128xf32>
    %95 = vector.shape_cast %94 : vector<1x64x128xf32> to vector<64x128xf32>
    %96 = vector.extract_strided_slice %95 {offsets = [0, 0], sizes = [32, 128], strides = [1, 1]} : vector<64x128xf32> to vector<32x128xf32>
    %cst_48 = arith.constant dense<0.000000e+00> : vector<8x128xf32>
    %97 = tpu.matmul %77, %96, %cst_48 {dimension_numbers = #tpu.dot_dimension_numbers<[1], [0], [0], [1], [0, 0, 1, 1], [], []>} : vector<8x32xf32>, vector<32x128xf32>, vector<8x128xf32> -> vector<8x128xf32>
    %98 = vector.extract_strided_slice %95 {offsets = [32, 0], sizes = [32, 128], strides = [1, 1]} : vector<64x128xf32> to vector<32x128xf32>
    %cst_49 = arith.constant dense<0.000000e+00> : vector<8x128xf32>
    %99 = tpu.matmul %79, %98, %cst_49 {dimension_numbers = #tpu.dot_dimension_numbers<[1], [0], [0], [1], [0, 0, 1, 1], [], []>} : vector<8x32xf32>, vector<32x128xf32>, vector<8x128xf32> -> vector<8x128xf32>
    %100 = arith.addf %97, %99 : vector<8x128xf32>
    %c1_50 = arith.constant 1 : index
    %c0_51 = arith.constant 0 : index
    %c0_52 = arith.constant 0 : index
    %101 = vector.load %arg3[%c1_50, %c0_51, %c0_52] : memref<3x1x128xf32, #tpu.memory_space<vmem>>, vector<1x1x128xf32>
    %102 = vector.shape_cast %101 : vector<1x1x128xf32> to vector<1x128xf32>
    %103 = vector.broadcast %102 : vector<1x128xf32> to vector<8x128xf32>
    %104 = arith.addf %100, %103 : vector<8x128xf32>
    %cst_53 = arith.constant 0.000000e+00 : f32
    %105 = vector.broadcast %cst_53 : f32 to vector<8x128xf32>
    %106 = arith.maximumf %104, %105 : vector<8x128xf32>
    %c1_54 = arith.constant 1 : index
    %c0_55 = arith.constant 0 : index
    %c0_56 = arith.constant 0 : index
    %107 = vector.load %arg4[%c1_54, %c0_55, %c0_56] : memref<3x1x128xf32, #tpu.memory_space<vmem>>, vector<1x1x128xf32>
    %108 = vector.shape_cast %107 : vector<1x1x128xf32> to vector<1x128xf32>
    %109 = vector.broadcast %108 : vector<1x128xf32> to vector<8x128xf32>
    %110 = arith.mulf %106, %109 : vector<8x128xf32>
    %cst_57 = arith.constant dense<0.000000e+00> : vector<8xf32>
    %111 = vector.multi_reduction <add>, %110, %cst_57 [1] : vector<8x128xf32> to vector<8xf32>
    %112 = vector.shape_cast %111 : vector<8xf32> to vector<8x1xf32>
    %c1_58 = arith.constant 1 : index
    %113 = memref.load %arg5[%c1_58] : memref<3xf32, #tpu.memory_space<smem>>
    %114 = vector.broadcast %113 : f32 to vector<8x1xf32>
    %115 = arith.addf %112, %114 : vector<8x1xf32>
    %cst_59 = arith.constant -1.000000e+01 : f32
    %cst_60 = arith.constant 1.000000e+01 : f32
    %116 = vector.broadcast %cst_59 : f32 to vector<8x1xf32>
    %117 = arith.maximumf %116, %115 : vector<8x1xf32>
    %118 = vector.broadcast %cst_60 : f32 to vector<8x1xf32>
    %119 = arith.minimumf %118, %117 : vector<8x1xf32>
    %120 = arith.negf %119 : vector<8x1xf32>
    %121 = math.exp %120 : vector<8x1xf32>
    %cst_61 = arith.constant 1.000000e+00 : f32
    %122 = vector.broadcast %cst_61 : f32 to vector<8x1xf32>
    %123 = arith.addf %122, %121 : vector<8x1xf32>
    %124 = arith.divf %122, %123 : vector<8x1xf32>
    %cst_62 = arith.constant 1.999990e+00 : f32
    %125 = vector.broadcast %cst_62 : f32 to vector<8x1xf32>
    %126 = arith.mulf %124, %125 : vector<8x1xf32>
    %cst_63 = arith.constant 9.99999974E-6 : f32
    %127 = vector.broadcast %cst_63 : f32 to vector<8x1xf32>
    %128 = arith.addf %126, %127 : vector<8x1xf32>
    %129 = tpu.reciprocal %128 {approx = true} : vector<8x1xf32> -> vector<8x1xf32>
    %130 = arith.mulf %128, %129 : vector<8x1xf32>
    %cst_64 = arith.constant 2.000000e+00 : f32
    %131 = vector.broadcast %cst_64 : f32 to vector<8x1xf32>
    %132 = arith.subf %131, %130 : vector<8x1xf32>
    %133 = arith.mulf %129, %132 : vector<8x1xf32>
    %134 = vector.shape_cast %93 : vector<8x1xf32> to vector<1x8xf32>
    %135 = vector.broadcast %134 : vector<1x8xf32> to vector<8x8xf32>
    %136 = vector.broadcast %133 : vector<8x1xf32> to vector<8x8xf32>
    %137 = arith.mulf %135, %136 : vector<8x8xf32>
    %c1_65 = arith.constant 1 : index
    %c0_66 = arith.constant 0 : index
    %c0_67 = arith.constant 0 : index
    %138 = vector.load %arg6[%c1_65, %c0_66, %c0_67] : memref<3x8x8xf32, #tpu.memory_space<vmem>>, vector<1x8x8xf32>
    %139 = vector.shape_cast %138 : vector<1x8x8xf32> to vector<8x8xf32>
    %140 = vector.shape_cast %137 : vector<8x8xf32> to vector<1x8x8xf32>
    tpu.vector_store %arg6[%c1_65, %c0_66, %c0_67], %140 {strides = array<i32>} : memref<3x8x8xf32, #tpu.memory_space<vmem>>, vector<1x8x8xf32>,
    %141 = math.log %128 : vector<8x1xf32>
    %cst_68 = arith.constant 4.000000e+00 : f32
    %142 = vector.broadcast %cst_68 : f32 to vector<8x1xf32>
    %143 = arith.mulf %142, %141 : vector<8x1xf32>
    %144 = arith.addf %143, %133 : vector<8x1xf32>
    %145 = vector.shape_cast %144 : vector<8x1xf32> to vector<1x8x1xf32>
    %cst_69 = arith.constant dense<0.000000e+00> : vector<1xf32>
    %146 = vector.multi_reduction <add>, %145, %cst_69 [1, 2] : vector<1x8x1xf32> to vector<1xf32>
    %147 = vector.shape_cast %146 : vector<1xf32> to vector<1x1x1xf32>
    %148 = vector.extract %147[0, 0, 0] : f32 from vector<1x1x1xf32>
    %cst_70 = arith.constant 8.000000e+00 : f32
    %149 = arith.divf %148, %cst_70 : f32
    %cst_71 = arith.constant 1.000000e-01 : f32
    %150 = arith.mulf %cst_71, %149 : f32
    %151 = arith.addf %75, %150 : f32
    %c2 = arith.constant 2 : index
    %c0_72 = arith.constant 0 : index
    %c0_73 = arith.constant 0 : index
    %152 = vector.load %arg0[%c2, %c0_72, %c0_73] : memref<3x8x32xf32, #tpu.memory_space<vmem>>, vector<1x8x32xf32>
    %153 = vector.shape_cast %152 : vector<1x8x32xf32> to vector<8x32xf32>
    %c2_74 = arith.constant 2 : index
    %c0_75 = arith.constant 0 : index
    %c0_76 = arith.constant 0 : index
    %154 = vector.load %arg1[%c2_74, %c0_75, %c0_76] : memref<3x8x32xf32, #tpu.memory_space<vmem>>, vector<1x8x32xf32>
    %155 = vector.shape_cast %154 : vector<1x8x32xf32> to vector<8x32xf32>
    %156 = arith.mulf %153, %155 : vector<8x32xf32>
    %cst_77 = arith.constant dense<0.000000e+00> : vector<8xf32>
    %157 = vector.multi_reduction <add>, %156, %cst_77 [1] : vector<8x32xf32> to vector<8xf32>
    %158 = vector.shape_cast %157 : vector<8xf32> to vector<8x1xf32>
    %159 = arith.mulf %153, %153 : vector<8x32xf32>
    %cst_78 = arith.constant dense<0.000000e+00> : vector<8xf32>
    %160 = vector.multi_reduction <add>, %159, %cst_78 [1] : vector<8x32xf32> to vector<8xf32>
    %161 = vector.shape_cast %160 : vector<8xf32> to vector<8x1xf32>
    %162 = arith.mulf %155, %155 : vector<8x32xf32>
    %cst_79 = arith.constant dense<0.000000e+00> : vector<8xf32>
    %163 = vector.multi_reduction <add>, %162, %cst_79 [1] : vector<8x32xf32> to vector<8xf32>
    %164 = vector.shape_cast %163 : vector<8xf32> to vector<8x1xf32>
    %165 = arith.mulf %161, %164 : vector<8x1xf32>
    %cst_80 = arith.constant 1.000000e-16 : f32
    %166 = vector.broadcast %cst_80 : f32 to vector<8x1xf32>
    %167 = arith.maximumf %165, %166 : vector<8x1xf32>
    %168 = math.rsqrt %167 : vector<8x1xf32>
    %169 = arith.mulf %158, %168 : vector<8x1xf32>
    %c2_81 = arith.constant 2 : index
    %c0_82 = arith.constant 0 : index
    %c0_83 = arith.constant 0 : index
    %170 = vector.load %arg2[%c2_81, %c0_82, %c0_83] : memref<3x64x128xf32, #tpu.memory_space<vmem>>, vector<1x64x128xf32>
    %171 = vector.shape_cast %170 : vector<1x64x128xf32> to vector<64x128xf32>
    %172 = vector.extract_strided_slice %171 {offsets = [0, 0], sizes = [32, 128], strides = [1, 1]} : vector<64x128xf32> to vector<32x128xf32>
    %cst_84 = arith.constant dense<0.000000e+00> : vector<8x128xf32>
    %173 = tpu.matmul %153, %172, %cst_84 {dimension_numbers = #tpu.dot_dimension_numbers<[1], [0], [0], [1], [0, 0, 1, 1], [], []>} : vector<8x32xf32>, vector<32x128xf32>, vector<8x128xf32> -> vector<8x128xf32>
    %174 = vector.extract_strided_slice %171 {offsets = [32, 0], sizes = [32, 128], strides = [1, 1]} : vector<64x128xf32> to vector<32x128xf32>
    %cst_85 = arith.constant dense<0.000000e+00> : vector<8x128xf32>
    %175 = tpu.matmul %155, %174, %cst_85 {dimension_numbers = #tpu.dot_dimension_numbers<[1], [0], [0], [1], [0, 0, 1, 1], [], []>} : vector<8x32xf32>, vector<32x128xf32>, vector<8x128xf32> -> vector<8x128xf32>
    %176 = arith.addf %173, %175 : vector<8x128xf32>
    %c2_86 = arith.constant 2 : index
    %c0_87 = arith.constant 0 : index
    %c0_88 = arith.constant 0 : index
    %177 = vector.load %arg3[%c2_86, %c0_87, %c0_88] : memref<3x1x128xf32, #tpu.memory_space<vmem>>, vector<1x1x128xf32>
    %178 = vector.shape_cast %177 : vector<1x1x128xf32> to vector<1x128xf32>
    %179 = vector.broadcast %178 : vector<1x128xf32> to vector<8x128xf32>
    %180 = arith.addf %176, %179 : vector<8x128xf32>
    %cst_89 = arith.constant 0.000000e+00 : f32
    %181 = vector.broadcast %cst_89 : f32 to vector<8x128xf32>
    %182 = arith.maximumf %180, %181 : vector<8x128xf32>
    %c2_90 = arith.constant 2 : index
    %c0_91 = arith.constant 0 : index
    %c0_92 = arith.constant 0 : index
    %183 = vector.load %arg4[%c2_90, %c0_91, %c0_92] : memref<3x1x128xf32, #tpu.memory_space<vmem>>, vector<1x1x128xf32>
    %184 = vector.shape_cast %183 : vector<1x1x128xf32> to vector<1x128xf32>
    %185 = vector.broadcast %184 : vector<1x128xf32> to vector<8x128xf32>
    %186 = arith.mulf %182, %185 : vector<8x128xf32>
    %cst_93 = arith.constant dense<0.000000e+00> : vector<8xf32>
    %187 = vector.multi_reduction <add>, %186, %cst_93 [1] : vector<8x128xf32> to vector<8xf32>
    %188 = vector.shape_cast %187 : vector<8xf32> to vector<8x1xf32>
    %c2_94 = arith.constant 2 : index
    %189 = memref.load %arg5[%c2_94] : memref<3xf32, #tpu.memory_space<smem>>
    %190 = vector.broadcast %189 : f32 to vector<8x1xf32>
    %191 = arith.addf %188, %190 : vector<8x1xf32>
    %cst_95 = arith.constant -1.000000e+01 : f32
    %cst_96 = arith.constant 1.000000e+01 : f32
    %192 = vector.broadcast %cst_95 : f32 to vector<8x1xf32>
    %193 = arith.maximumf %192, %191 : vector<8x1xf32>
    %194 = vector.broadcast %cst_96 : f32 to vector<8x1xf32>
    %195 = arith.minimumf %194, %193 : vector<8x1xf32>
    %196 = arith.negf %195 : vector<8x1xf32>
    %197 = math.exp %196 : vector<8x1xf32>
    %cst_97 = arith.constant 1.000000e+00 : f32
    %198 = vector.broadcast %cst_97 : f32 to vector<8x1xf32>
    %199 = arith.addf %198, %197 : vector<8x1xf32>
    %200 = arith.divf %198, %199 : vector<8x1xf32>
    %cst_98 = arith.constant 1.999990e+00 : f32
    %201 = vector.broadcast %cst_98 : f32 to vector<8x1xf32>
    %202 = arith.mulf %200, %201 : vector<8x1xf32>
    %cst_99 = arith.constant 9.99999974E-6 : f32
    %203 = vector.broadcast %cst_99 : f32 to vector<8x1xf32>
    %204 = arith.addf %202, %203 : vector<8x1xf32>
    %205 = tpu.reciprocal %204 {approx = true} : vector<8x1xf32> -> vector<8x1xf32>
    %206 = arith.mulf %204, %205 : vector<8x1xf32>
    %cst_100 = arith.constant 2.000000e+00 : f32
    %207 = vector.broadcast %cst_100 : f32 to vector<8x1xf32>
    %208 = arith.subf %207, %206 : vector<8x1xf32>
    %209 = arith.mulf %205, %208 : vector<8x1xf32>
    %210 = vector.shape_cast %169 : vector<8x1xf32> to vector<1x8xf32>
    %211 = vector.broadcast %210 : vector<1x8xf32> to vector<8x8xf32>
    %212 = vector.broadcast %209 : vector<8x1xf32> to vector<8x8xf32>
    %213 = arith.mulf %211, %212 : vector<8x8xf32>
    %c2_101 = arith.constant 2 : index
    %c0_102 = arith.constant 0 : index
    %c0_103 = arith.constant 0 : index
    %214 = vector.load %arg6[%c2_101, %c0_102, %c0_103] : memref<3x8x8xf32, #tpu.memory_space<vmem>>, vector<1x8x8xf32>
    %215 = vector.shape_cast %214 : vector<1x8x8xf32> to vector<8x8xf32>
    %216 = vector.shape_cast %213 : vector<8x8xf32> to vector<1x8x8xf32>
    tpu.vector_store %arg6[%c2_101, %c0_102, %c0_103], %216 {strides = array<i32>} : memref<3x8x8xf32, #tpu.memory_space<vmem>>, vector<1x8x8xf32>,
    %217 = math.log %204 : vector<8x1xf32>
    %cst_104 = arith.constant 4.000000e+00 : f32
    %218 = vector.broadcast %cst_104 : f32 to vector<8x1xf32>
    %219 = arith.mulf %218, %217 : vector<8x1xf32>
    %220 = arith.addf %219, %209 : vector<8x1xf32>
    %221 = vector.shape_cast %220 : vector<8x1xf32> to vector<1x8x1xf32>
    %cst_105 = arith.constant dense<0.000000e+00> : vector<1xf32>
    %222 = vector.multi_reduction <add>, %221, %cst_105 [1, 2] : vector<1x8x1xf32> to vector<1xf32>
    %223 = vector.shape_cast %222 : vector<1xf32> to vector<1x1x1xf32>
    %224 = vector.extract %223[0, 0, 0] : f32 from vector<1x1x1xf32>
    %cst_106 = arith.constant 8.000000e+00 : f32
    %225 = arith.divf %224, %cst_106 : f32
    %cst_107 = arith.constant 1.000000e-01 : f32
    %226 = arith.mulf %cst_107, %225 : f32
    %227 = arith.addf %151, %226 : f32
    %c0_108 = arith.constant 0 : index
    %228 = memref.load %arg7[%c0_108] : memref<1xf32, #tpu.memory_space<smem>>
    memref.store %227, %arg7[%c0_108] : memref<1xf32, #tpu.memory_space<smem>>
    return
  }
}

</mosaic_0001>

<llo_original>
// kernel: tpu_custom_call.1
$region0: #{tpu_custom_call.1}
  #allocation0 [shape = 'u32[]', space=smem, size = 0x4, offset = 0x4, fixed_abs, tag = 'smem constant byte address 0x4 - core index']
  #allocation1 [shape = 'u32[144,128]{1,0:T(1,128)}', space=vmem, size = 0x12000, scoped, tag = 'internal scratch']
  %s0 = inlined_call_operand.hbm [shape: f32[3,8,32], index: 0, kind: input, shape index: {}]
  %s1 = inlined_call_operand.hbm [shape: f32[3,8,32], index: 1, kind: input, shape index: {}]
  %s2 = inlined_call_operand.hbm [shape: f32[3,64,128], index: 2, kind: input, shape index: {}]
  %s3 = inlined_call_operand.vmem [shape: f32[3,1,128], index: 3, kind: input, shape index: {}]
  %s4 = inlined_call_operand.vmem [shape: f32[3,1,128], index: 4, kind: input, shape index: {}]
  %s5 = inlined_call_operand.vmem [shape: f32[3], index: 5, kind: input, shape index: {}]
  %s6 = inlined_call_operand.hbm [shape: f32[3,8,8], index: 6, kind: output, shape index: {0}]
  %s7 = inlined_call_operand.hbm [shape: f32[1], index: 7, kind: output, shape index: {1}]
  %8 = xla_tuple %s6, %s7
  %s9 = sld [smem:[#allocation0]]
  $region58: #{tpu_custom_call.1} parent=0
    _
  %s11 = ssub.s32 1, %s9
  %s12 = scalar_select 0, %s11, %s9
  $region1: #{tpu_custom_call.1} parent=0
    #allocation2 [shape = 'u8[12288]{0}', space=vmem, size = 0x3000, scoped, tag = 'input window, operand 0, single buffered']
    #allocation3 [shape = 's32[1]{0}', space=sflag, size = 0x4, scoped, tag = 'scoped memory for tpu_custom_call.1']
    #allocation4 [shape = 's32[1]{0}', space=sflag, size = 0x4, scoped, tag = 'scoped memory for tpu_custom_call.1']
    #allocation5 [shape = 's32[1]{0}', space=sflag, size = 0x4, scoped, tag = 'scoped memory for tpu_custom_call.1']
    #allocation6 [shape = 's32[1]{0}', space=sflag, size = 0x4, scoped, tag = 'scoped memory for tpu_custom_call.1']
    #allocation7 [shape = 'u8[12288]{0}', space=vmem, size = 0x3000, scoped, tag = 'input window, operand 1, single buffered']
    #allocation8 [shape = 's32[1]{0}', space=sflag, size = 0x4, scoped, tag = 'scoped memory for tpu_custom_call.1']
    #allocation9 [shape = 'u8[98304]{0}', space=vmem, size = 0x18000, scoped, tag = 'input window, operand 2, single buffered']
    #allocation10 [shape = 'u8[512]{0}', space=smem, size = 0x200, scoped, tag = 'input window, operand 5, single buffered']
    #allocation11 [shape = 'u8[12288]{0}', space=vmem, size = 0x3000, scoped, tag = 'output window, operand 0, single buffered']
    #allocation12 [shape = 'u8[512]{0}', space=smem, size = 0x200, scoped, tag = 'output window, operand 1, single buffered']
    %13 = vsyncpa [#allocation3], 0
    %14 = vsyncpa [#allocation8], 0
    %15 = vsyncpa [#allocation6], 0
    %16 = vsyncpa [#allocation4], 0
    %17 = vsyncpa [#allocation5], 0
    // Predicated region
    $region2: #{tpu_custom_call.1} parent=1 // pred_check
      _
    $region3: #{tpu_custom_call.1} parent=1 // pred_check_branch
      %19 = sbr.rel (0) target = $region5
    $region4: #{tpu_custom_call.1} parent=1 // pred_region
      %s21 = ssub.s32 384, 384
      %22 = vsyncadd [#allocation3], %s21
      %s23 = sshll.u32 [#allocation2], 4
      %s24 = int_to_ptr.vmem [resolvable:$true] %s23
      %29 = dma.hbm_to_vmem [thread:$0]  %s0, 384, %s24, [#allocation3], 128, 128, 8
    $region5: #{tpu_custom_call.1} parent=1 // pred_fallthru
      _
    // Predicated region
    $region6: #{tpu_custom_call.1} parent=1 // pred_check
      _
    $region7: #{tpu_custom_call.1} parent=1 // pred_check_branch
      %31 = sbr.rel (0) target = $region9
    $region8: #{tpu_custom_call.1} parent=1 // pred_region
      %s33 = ssub.s32 384, 384
      %34 = vsyncadd [#allocation8], %s33
      %s35 = sshll.u32 [#allocation7], 4
      %s36 = int_to_ptr.vmem [resolvable:$true] %s35
      %41 = dma.hbm_to_vmem [thread:$0]  %s1, 384, %s36, [#allocation8], 128, 128, 8
    $region9: #{tpu_custom_call.1} parent=1 // pred_fallthru
      _
    // Predicated region
    $region10: #{tpu_custom_call.1} parent=1 // pred_check
      _
    $region11: #{tpu_custom_call.1} parent=1 // pred_check_branch
      %43 = sbr.rel (0) target = $region13
    $region12: #{tpu_custom_call.1} parent=1 // pred_region
      %s45 = ssub.s32 3072, 3072
      %46 = vsyncadd [#allocation8], %s45
      %s47 = sshll.u32 [#allocation9], 4
      %s48 = int_to_ptr.vmem [resolvable:$true] %s47
      %53 = dma.hbm_to_vmem [thread:$0]  %s2, 3072, %s48, [#allocation8], 128, 128, 8
    $region13: #{tpu_custom_call.1} parent=1 // pred_fallthru
      _
    // Predicated region
    $region14: #{tpu_custom_call.1} parent=1 // pred_check
      _
    $region15: #{tpu_custom_call.1} parent=1 // pred_check_branch
      %55 = sbr.rel (0) target = $region17
    $region16: #{tpu_custom_call.1} parent=1 // pred_region
      _
    $region17: #{tpu_custom_call.1} parent=1 // pred_fallthru
      _
    // Predicated region
    $region18: #{tpu_custom_call.1} parent=1 // pred_check
      _
    $region19: #{tpu_custom_call.1} parent=1 // pred_check_branch
      %57 = sbr.rel (0) target = $region21
    $region20: #{tpu_custom_call.1} parent=1 // pred_region
      _
    $region21: #{tpu_custom_call.1} parent=1 // pred_fallthru
      _
    // Predicated region
    $region22: #{tpu_custom_call.1} parent=1 // pred_check
      _
    $region23: #{tpu_custom_call.1} parent=1 // pred_check_branch
      %59 = sbr.rel (0) target = $region25
    $region24: #{tpu_custom_call.1} parent=1 // pred_region
      %s61 = ssub.s32 16, 16
      %62 = vsyncadd [#allocation6], %s61
      %s64 = sshll.u32 %s5, 4
      %s65 = int_to_ptr.vmem [resolvable:$true] %s64
      %67 = dma.vmem_to_smem %s65, 16, [#allocation10], [#allocation6]
    $region25: #{tpu_custom_call.1} parent=1 // pred_fallthru
      _
    // Predicated region
    $region26: #{tpu_custom_call.1} parent=1 // pred_check
      _
    $region27: #{tpu_custom_call.1} parent=1 // pred_check_branch
      %69 = sbr.rel (0) target = $region29
    $region28: #{tpu_custom_call.1} parent=1 // pred_region
      %70 = dma.done [#allocation3], 384
    $region29: #{tpu_custom_call.1} parent=1 // pred_fallthru
      _
    // Predicated region
    $region30: #{tpu_custom_call.1} parent=1 // pred_check
      _
    $region31: #{tpu_custom_call.1} parent=1 // pred_check_branch
      %72 = sbr.rel (0) target = $region33
    $region32: #{tpu_custom_call.1} parent=1 // pred_region
      %73 = dma.done [#allocation8], 384
    $region33: #{tpu_custom_call.1} parent=1 // pred_fallthru
      _
    // Predicated region
    $region34: #{tpu_custom_call.1} parent=1 // pred_check
      _
    $region35: #{tpu_custom_call.1} parent=1 // pred_check_branch
      %75 = sbr.rel (0) target = $region37
    $region36: #{tpu_custom_call.1} parent=1 // pred_region
      %76 = dma.done [#allocation8], 3072
    $region37: #{tpu_custom_call.1} parent=1 // pred_fallthru
      _
    // Predicated region
    $region38: #{tpu_custom_call.1} parent=1 // pred_check
      _
    $region39: #{tpu_custom_call.1} parent=1 // pred_check_branch
      %78 = sbr.rel (0) target = $region41
    $region40: #{tpu_custom_call.1} parent=1 // pred_region
      %79 = dma.done [#allocation6], 16
    $region41: #{tpu_custom_call.1} parent=1 // pred_fallthru
      _
    %80 = sfence
    %v81 = vld [vmem:[#allocation2] sm:$0xff]
    %v82 = vld [vmem:[#allocation7] sm:$0xff]
    %v83 = vmul.f32 %v81, %v82
    %vm84 = vcmask 261120
    %v85 = vsel %vm84, %v83, 0.0
    %86 = vadd.xlane.f32.xlu0 %v85
    %v87 = vpop.xlane.xlu0 %86
    %v88 = vmul.f32 %v81, %v81
    %v89 = vsel %vm84, %v88, 0.0
    %90 = vadd.xlane.f32.xlu0 %v89
    %v91 = vpop.xlane.xlu0 %90
    %v92 = vmul.f32 %v82, %v82
    %v93 = vsel %vm84, %v92, 0.0
    %94 = vadd.xlane.f32.xlu0 %v93
    %v95 = vpop.xlane.xlu0 %94
    %v96 = vmul.f32 %v91, %v95
    %v97 = vmax.f32 %v96, 1e-16
    %v98 = vrsqrt.pop %v97
    %v99 = vmul.f32 %v87, %v98
    %v100 = vld [vmem:[#allocation9] sm:$0xff]
    %v101 = vld [vmem:[#allocation9 + $0x8] sm:$0xff]
    %v102 = vld [vmem:[#allocation9 + $0x10] sm:$0xff]
    %v103 = vld [vmem:[#allocation9 + $0x18] sm:$0xff]
    %v104 = vld [vmem:[#allocation9 + $0x20] sm:$0xff]
    %v105 = vld [vmem:[#allocation9 + $0x28] sm:$0xff]
    %v106 = vld [vmem:[#allocation9 + $0x30] sm:$0xff]
    %v107 = vld [vmem:[#allocation9 + $0x38] sm:$0xff]
    %v109 = vsel %vm84, %v82, 0
    %111 = vmatprep.subr.mxu0 0.0
    %112 = vmatpush1.msra.mxu0 %v104
    %113 = vmatprep.subr.mxu0 0.0
    %114 = vmatpush1.msra.mxu0 %v105
    %115 = vmatprep.subr.mxu0 0.0
    %116 = vmatpush1.msra.mxu0 %v106
    %117 = vmatprep.subr.mxu0 0.0
    %118 = vmatpush1.msra.mxu0 %v107
    %119 = vmatprep.subr.mxu0 0.0
    %120 = vmatpush1.msra.mxu0 0.0
    %121 = vmatprep.subr.mxu0 0.0
    %122 = vmatpush1.msra.mxu0 0.0
    %123 = vmatprep.subr.mxu0 0.0
    %124 = vmatpush1.msra.mxu0 0.0
    %125 = vmatprep.subr.mxu0 0.0
    %126 = vmatpush1.msra.mxu0 0.0
    %127 = vmatprep.subr.mxu0 0.0
    %128 = vmatpush1.msra.mxu0 0.0
    %129 = vmatprep.subr.mxu0 0.0
    %130 = vmatpush1.msra.mxu0 0.0
    %131 = vmatprep.subr.mxu0 0.0
    %132 = vmatpush1.msra.mxu0 0.0
    %133 = vmatprep.subr.mxu0 0.0
    %134 = vmatpush1.msra.mxu0 0.0
    %135 = vmatprep.subr.mxu0 0.0
    %136 = vmatpush1.msra.mxu0 0.0
    %137 = vmatprep.subr.mxu0 0.0
    %138 = vmatpush1.msra.mxu0 0.0
    %139 = vmatprep.subr.mxu0 0.0
    %140 = vmatpush1.msra.mxu0 0.0
    %141 = vmatprep.subr.mxu0 0.0
    %142 = vmatpush1.msra.mxu0 0.0
    %143 = vmatprep.subr.mxu0 0.0
    %144 = vmatpush1.msra.mxu0 0.0
    %145 = vmatprep.subr.mxu0 0.0
    %146 = vmatpush1.msra.mxu0 0.0
    %147 = vmatprep.subr.mxu0 0.0
    %148 = vmatpush1.msra.mxu0 0.0
    %149 = vmatprep.subr.mxu0 0.0
    %150 = vmatpush1.msra.mxu0 0.0
    %151 = vmatprep.subr.mxu0 0.0
    %152 = vmatpush1.msra.mxu0 0.0
    %153 = vmatprep.subr.mxu0 0.0
    %154 = vmatpush1.msra.mxu0 0.0
    %155 = vmatprep.subr.mxu0 0.0
    %156 = vmatpush1.msra.mxu0 0.0
    %157 = vmatprep.subr.mxu0 0.0
    %158 = vmatpush1.msra.mxu0 0.0
    %159 = vmatprep.subr.mxu0 0.0
    %160 = vmatpush1.msra.mxu0 0.0
    %161 = vmatprep.subr.mxu0 0.0
    %162 = vmatpush1.msra.mxu0 0.0
    %163 = vmatprep.subr.mxu0 0.0
    %164 = vmatpush1.msra.mxu0 0.0
    %165 = vmatprep.subr.mxu0 0.0
    %166 = vmatpush1.msra.mxu0 0.0
    %167 = vmatprep.subr.mxu0 0.0
    %168 = vmatpush1.msra.mxu0 0.0
    %169 = vmatprep.subr.mxu0 0.0
    %170 = vmatpush1.msra.mxu0 0.0
    %171 = vmatprep.subr.mxu0 0.0
    %172 = vmatpush1.msra.mxu0 0.0
    %173 = vmatprep.subr.mxu0 0.0
    %174 = vmatpush1.msra.mxu0 0.0
    %175 = vmatprep.mubr.f32.mxu0 0.0
    %176 = vmatmul.mubr.f32.gmra.mrb[0].mxu0 %v109
    %v177 = vpop.f32.mrb[0].mxu0
    %v178 = vadd.f32 0.0, %v177
    %v179 = vpop.f32.mrb[0].mxu0
    %180 = vdwg.mxu0
    %v182 = vsel %vm84, %v81, 0
    %184 = vmatprep.subr.mxu0 0.0
    %185 = vmatpush1.msra.mxu0 %v100
    %186 = vmatprep.subr.mxu0 0.0
    %187 = vmatpush1.msra.mxu0 %v101
    %188 = vmatprep.subr.mxu0 0.0
    %189 = vmatpush1.msra.mxu0 %v102
    %190 = vmatprep.subr.mxu0 0.0
    %191 = vmatpush1.msra.mxu0 %v103
    %192 = vmatprep.subr.mxu0 0.0
    %193 = vmatpush1.msra.mxu0 0.0
    %194 = vmatprep.subr.mxu0 0.0
    %195 = vmatpush1.msra.mxu0 0.0
    %196 = vmatprep.subr.mxu0 0.0
    %197 = vmatpush1.msra.mxu0 0.0
    %198 = vmatprep.subr.mxu0 0.0
    %199 = vmatpush1.msra.mxu0 0.0
    %200 = vmatprep.subr.mxu0 0.0
    %201 = vmatpush1.msra.mxu0 0.0
    %202 = vmatprep.subr.mxu0 0.0
    %203 = vmatpush1.msra.mxu0 0.0
    %204 = vmatprep.subr.mxu0 0.0
    %205 = vmatpush1.msra.mxu0 0.0
    %206 = vmatprep.subr.mxu0 0.0
    %207 = vmatpush1.msra.mxu0 0.0
    %208 = vmatprep.subr.mxu0 0.0
    %209 = vmatpush1.msra.mxu0 0.0
    %210 = vmatprep.subr.mxu0 0.0
    %211 = vmatpush1.msra.mxu0 0.0
    %212 = vmatprep.subr.mxu0 0.0
    %213 = vmatpush1.msra.mxu0 0.0
    %214 = vmatprep.subr.mxu0 0.0
    %215 = vmatpush1.msra.mxu0 0.0
    %216 = vmatprep.subr.mxu0 0.0
    %217 = vmatpush1.msra.mxu0 0.0
    %218 = vmatprep.subr.mxu0 0.0
    %219 = vmatpush1.msra.mxu0 0.0
    %220 = vmatprep.subr.mxu0 0.0
    %221 = vmatpush1.msra.mxu0 0.0
    %222 = vmatprep.subr.mxu0 0.0
    %223 = vmatpush1.msra.mxu0 0.0
    %224 = vmatprep.subr.mxu0 0.0
    %225 = vmatpush1.msra.mxu0 0.0
    %226 = vmatprep.subr.mxu0 0.0
    %227 = vmatpush1.msra.mxu0 0.0
    %228 = vmatprep.subr.mxu0 0.0
    %229 = vmatpush1.msra.mxu0 0.0
    %230 = vmatprep.subr.mxu0 0.0
    %231 = vmatpush1.msra.mxu0 0.0
    %232 = vmatprep.subr.mxu0 0.0
    %233 = vmatpush1.msra.mxu0 0.0
    %234 = vmatprep.subr.mxu0 0.0
    %235 = vmatpush1.msra.mxu0 0.0
    %236 = vmatprep.subr.mxu0 0.0
    %237 = vmatpush1.msra.mxu0 0.0
    %238 = vmatprep.subr.mxu0 0.0
    %239 = vmatpush1.msra.mxu0 0.0
    %240 = vmatprep.subr.mxu0 0.0
    %241 = vmatpush1.msra.mxu0 0.0
    %242 = vmatprep.subr.mxu0 0.0
    %243 = vmatpush1.msra.mxu0 0.0
    %244 = vmatprep.subr.mxu0 0.0
    %245 = vmatpush1.msra.mxu0 0.0
    %246 = vmatprep.subr.mxu0 0.0
    %247 = vmatpush1.msra.mxu0 0.0
    %248 = vmatprep.mubr.f32.mxu0 0.0
    %249 = vmatmul.mubr.f32.gmra.mrb[0].mxu0 %v182
    %v250 = vpop.f32.mrb[0].mxu0
    %v251 = vadd.f32 %v178, %v250
    %v252 = vpop.f32.mrb[0].mxu0
    %253 = vdwg.mxu0
    %v254 = vld [vmem:[%s3] sm:$0x1]
    %v256 = vlaneseq
    %v257 = vshrl.u32 %v256, 7
    %v258 = vsub.s32 0, %v257
    %v259 = vrot.slane %v254, %v258
    %v261 = vadd.f32 %v251, %v259
    %v262 = vmax.f32 %v261, 0.0
    %v263 = vld [vmem:[%s4] sm:$0x1]
    %v265 = vlaneseq
    %v266 = vshrl.u32 %v265, 7
    %v267 = vsub.s32 0, %v266
    %v268 = vrot.slane %v263, %v267
    %v270 = vmul.f32 %v262, %v268
    %271 = vadd.xlane.f32.xlu0 %v270
    %v272 = vpop.xlane.xlu0 %271
    %s273 = sld [smem:[#allocation10]]
    %v274 = vstv %s273
    %v275 = vadd.f32 %v272, %v274
    %v276 = vmax.f32 %v275, -10.0
    %v277 = vmin.f32 %v276, 10.0
    %v278 = vxor.u32 %v277, 2147483648
    %v279 = vmul.f32 %v278, 1.442695
    %v280 = vpow.pop %v279
    %v281 = vadd.f32 %v280, 1.0
    %v282 = vrcp.pop %v281
    %v283 = vmul.f32 1.0, %v282
    %v284 = vmul.f32 %v283, 1.99999
    %v285 = vadd.f32 %v284, 1e-05
    %v286 = vrcp.pop %v285
    %v287 = vmul.f32 %v285, %v286
    %v288 = vsub.f32 2.0, %v287
    %v289 = vmul.f32 %v286, %v288
    %v291 = vlaneseq
    %v292 = vshrl.u32 %v291, 7
    %v293 = vsub.s32 0, %v292
    %v294 = vrot.slane %v289, %v293
    %v295 = vlaneseq
    %v296 = vshrl.u32 %v295, 7
    %v297 = vsub.s32 1, %v296
    %v298 = vrot.slane %v289, %v297
    %v299 = vlaneseq
    %v300 = vshrl.u32 %v299, 7
    %v301 = vsub.s32 2, %v300
    %v302 = vrot.slane %v289, %v301
    %v303 = vlaneseq
    %v304 = vshrl.u32 %v303, 7
    %v305 = vsub.s32 3, %v304
    %v306 = vrot.slane %v289, %v305
    %v307 = vlaneseq
    %v308 = vshrl.u32 %v307, 7
    %v309 = vsub.s32 4, %v308
    %v310 = vrot.slane %v289, %v309
    %v311 = vlaneseq
    %v312 = vshrl.u32 %v311, 7
    %v313 = vsub.s32 5, %v312
    %v314 = vrot.slane %v289, %v313
    %v315 = vlaneseq
    %v316 = vshrl.u32 %v315, 7
    %v317 = vsub.s32 6, %v316
    %v318 = vrot.slane %v289, %v317
    %v319 = vlaneseq
    %v320 = vshrl.u32 %v319, 7
    %v321 = vsub.s32 7, %v320
    %v322 = vrot.slane %v289, %v321
    %v331 = vmul.f32 %v99, %v294
    %v332 = vmul.f32 %v99, %v298
    %v333 = vmul.f32 %v99, %v302
    %v334 = vmul.f32 %v99, %v306
    %v335 = vmul.f32 %v99, %v310
    %v336 = vmul.f32 %v99, %v314
    %v337 = vmul.f32 %v99, %v318
    %v338 = vmul.f32 %v99, %v322
    %347 = vset.pattern.permute.xlu0 0
    %348 = vperm.xlu0 %347, %v331
    %v349 = vpop.permute.xlu0 %348
    %350 = vset.pattern.permute.xlu0 0
    %351 = vperm.xlu0 %350, %v332
    %v352 = vpop.permute.xlu0 %351
    %353 = vset.pattern.permute.xlu0 0
    %354 = vperm.xlu0 %353, %v333
    %v355 = vpop.permute.xlu0 %354
    %356 = vset.pattern.permute.xlu0 0
    %357 = vperm.xlu0 %356, %v334
    %v358 = vpop.permute.xlu0 %357
    %359 = vset.pattern.permute.xlu0 0
    %360 = vperm.xlu0 %359, %v335
    %v361 = vpop.permute.xlu0 %360
    %362 = vset.pattern.permute.xlu0 0
    %363 = vperm.xlu0 %362, %v336
    %v364 = vpop.permute.xlu0 %363
    %365 = vset.pattern.permute.xlu0 0
    %366 = vperm.xlu0 %365, %v337
    %v367 = vpop.permute.xlu0 %366
    %368 = vset.pattern.permute.xlu0 0
    %369 = vperm.xlu0 %368, %v338
    %v370 = vpop.permute.xlu0 %369
    %v371 = vlaneseq
    %v372 = vand.u32 %v371, 127
    %v373 = vlaneseq
    %v374 = vshrl.u32 %v373, 7
    %v375 = vsub.s32 %v372, %v374
    %v376 = vrot.slane %v349, %v375
    %v377 = vlaneseq
    %v378 = vshrl.u32 %v377, 7
    %v379 = vsub.s32 %v372, %v378
    %v380 = vrot.slane %v352, %v379
    %v381 = vlaneseq
    %v382 = vshrl.u32 %v381, 7
    %v383 = vsub.s32 %v372, %v382
    %v384 = vrot.slane %v355, %v383
    %v385 = vlaneseq
    %v386 = vshrl.u32 %v385, 7
    %v387 = vsub.s32 %v372, %v386
    %v388 = vrot.slane %v358, %v387
    %v389 = vlaneseq
    %v390 = vshrl.u32 %v389, 7
    %v391 = vsub.s32 %v372, %v390
    %v392 = vrot.slane %v361, %v391
    %v393 = vlaneseq
    %v394 = vshrl.u32 %v393, 7
    %v395 = vsub.s32 %v372, %v394
    %v396 = vrot.slane %v364, %v395
    %v397 = vlaneseq
    %v398 = vshrl.u32 %v397, 7
    %v399 = vsub.s32 %v372, %v398
    %v400 = vrot.slane %v367, %v399
    %v401 = vlaneseq
    %v402 = vshrl.u32 %v401, 7
    %v403 = vsub.s32 %v372, %v402
    %v404 = vrot.slane %v370, %v403
    %vm405 = vcmask 1041409
    %v406 = vsel %vm405, %v380, %v376
    %vm407 = vcmask 1042434
    %v408 = vsel %vm407, %v384, %v406
    %vm409 = vcmask 1043459
    %v410 = vsel %vm409, %v388, %v408
    %vm411 = vcmask 1044484
    %v412 = vsel %vm411, %v392, %v410
    %vm413 = vcmask 1045509
    %v414 = vsel %vm413, %v396, %v412
    %vm415 = vcmask 1046534
    %v416 = vsel %vm415, %v400, %v414
    %vm417 = vcmask 1047559
    %v418 = vsel %vm417, %v404, %v416
    %vm420 = vcmask 64512
    %421 = vst.msk [vmem:[#allocation11] sm:$0xff] %vm420, %v418
    %v422 = vlog2.pop %v285
    %v423 = vmul.f32 %v422, 0.6931472
    %v424 = vmul.f32 %v423, 4.0
    %v425 = vadd.f32 %v424, %v289
    %vm426 = vcmask 7168
    %v427 = vsel %vm426, %v425, 0.0
    %428 = vadd.xlane.f32.xlu0 %v427
    %v429 = vpop.xlane.xlu0 %428
    %v430 = vrot.slane %v429, 4
    %v431 = vadd.f32 %v429, %v430
    %v432 = vrot.slane %v431, 2
    %v433 = vadd.f32 %v431, %v432
    %v434 = vrot.slane %v433, 1
    %v435 = vadd.f32 %v433, %v434
    %s436 = vtos %v435
    %v437 = vrcp.pop 8.0
    %s438 = vtos %v437
    %s439 = smul.f32 %s436, %s438
    %s440 = smul.f32 %s439, 0.1
    %s441 = sadd.f32 %s440, 0.0
    %s442 = scalar_lea.vmem [#allocation2], 8
    %v443 = vld [vmem:[%s442] sm:$0xff]
    %s444 = scalar_lea.vmem [#allocation7], 8
    %v445 = vld [vmem:[%s444] sm:$0xff]
    %v446 = vmul.f32 %v443, %v445
    %v447 = vsel %vm84, %v446, 0.0
    %448 = vadd.xlane.f32.xlu0 %v447
    %v449 = vpop.xlane.xlu0 %448
    %v450 = vmul.f32 %v443, %v443
    %v451 = vsel %vm84, %v450, 0.0
    %452 = vadd.xlane.f32.xlu0 %v451
    %v453 = vpop.xlane.xlu0 %452
    %v454 = vmul.f32 %v445, %v445
    %v455 = vsel %vm84, %v454, 0.0
    %456 = vadd.xlane.f32.xlu0 %v455
    %v457 = vpop.xlane.xlu0 %456
    %v458 = vmul.f32 %v453, %v457
    %v459 = vmax.f32 %v458, 1e-16
    %v460 = vrsqrt.pop %v459
    %v461 = vmul.f32 %v449, %v460
    %s462 = scalar_lea.vmem [#allocation9], 64
    %v463 = vld [vmem:[%s462] sm:$0xff]
    %v464 = vld [vmem:[%s462 + $0x8] sm:$0xff]
    %v465 = vld [vmem:[%s462 + $0x10] sm:$0xff]
    %v466 = vld [vmem:[%s462 + $0x18] sm:$0xff]
    %v467 = vld [vmem:[%s462 + $0x20] sm:$0xff]
    %v468 = vld [vmem:[%s462 + $0x28] sm:$0xff]
    %v469 = vld [vmem:[%s462 + $0x30] sm:$0xff]
    %v470 = vld [vmem:[%s462 + $0x38] sm:$0xff]
    %v472 = vsel %vm84, %v445, 0
    %474 = vmatprep.subr.mxu0 0.0
    %475 = vmatpush1.msra.mxu0 %v467
    %476 = vmatprep.subr.mxu0 0.0
    %477 = vmatpush1.msra.mxu0 %v468
    %478 = vmatprep.subr.mxu0 0.0
    %479 = vmatpush1.msra.mxu0 %v469
    %480 = vmatprep.subr.mxu0 0.0
    %481 = vmatpush1.msra.mxu0 %v470
    %482 = vmatprep.subr.mxu0 0.0
    %483 = vmatpush1.msra.mxu0 0.0
    %484 = vmatprep.subr.mxu0 0.0
    %485 = vmatpush1.msra.mxu0 0.0
    %486 = vmatprep.subr.mxu0 0.0
    %487 = vmatpush1.msra.mxu0 0.0
    %488 = vmatprep.subr.mxu0 0.0
    %489 = vmatpush1.msra.mxu0 0.0
    %490 = vmatprep.subr.mxu0 0.0
    %491 = vmatpush1.msra.mxu0 0.0
    %492 = vmatprep.subr.mxu0 0.0
    %493 = vmatpush1.msra.mxu0 0.0
    %494 = vmatprep.subr.mxu0 0.0
    %495 = vmatpush1.msra.mxu0 0.0
    %496 = vmatprep.subr.mxu0 0.0
    %497 = vmatpush1.msra.mxu0 0.0
    %498 = vmatprep.subr.mxu0 0.0
    %499 = vmatpush1.msra.mxu0 0.0
    %500 = vmatprep.subr.mxu0 0.0
    %501 = vmatpush1.msra.mxu0 0.0
    %502 = vmatprep.subr.mxu0 0.0
    %503 = vmatpush1.msra.mxu0 0.0
    %504 = vmatprep.subr.mxu0 0.0
    %505 = vmatpush1.msra.mxu0 0.0
    %506 = vmatprep.subr.mxu0 0.0
    %507 = vmatpush1.msra.mxu0 0.0
    %508 = vmatprep.subr.mxu0 0.0
    %509 = vmatpush1.msra.mxu0 0.0
    %510 = vmatprep.subr.mxu0 0.0
    %511 = vmatpush1.msra.mxu0 0.0
    %512 = vmatprep.subr.mxu0 0.0
    %513 = vmatpush1.msra.mxu0 0.0
    %514 = vmatprep.subr.mxu0 0.0
    %515 = vmatpush1.msra.mxu0 0.0
    %516 = vmatprep.subr.mxu0 0.0
    %517 = vmatpush1.msra.mxu0 0.0
    %518 = vmatprep.subr.mxu0 0.0
    %519 = vmatpush1.msra.mxu0 0.0
    %520 = vmatprep.subr.mxu0 0.0
    %521 = vmatpush1.msra.mxu0 0.0
    %522 = vmatprep.subr.mxu0 0.0
    %523 = vmatpush1.msra.mxu0 0.0
    %524 = vmatprep.subr.mxu0 0.0
    %525 = vmatpush1.msra.mxu0 0.0
    %526 = vmatprep.subr.mxu0 0.0
    %527 = vmatpush1.msra.mxu0 0.0
    %528 = vmatprep.subr.mxu0 0.0
    %529 = vmatpush1.msra.mxu0 0.0
    %530 = vmatprep.subr.mxu0 0.0
    %531 = vmatpush1.msra.mxu0 0.0
    %532 = vmatprep.subr.mxu0 0.0
    %533 = vmatpush1.msra.mxu0 0.0
    %534 = vmatprep.subr.mxu0 0.0
    %535 = vmatpush1.msra.mxu0 0.0
    %536 = vmatprep.subr.mxu0 0.0
    %537 = vmatpush1.msra.mxu0 0.0
    %538 = vmatprep.mubr.f32.mxu0 0.0
    %539 = vmatmul.mubr.f32.gmra.mrb[0].mxu0 %v472
    %v540 = vpop.f32.mrb[0].mxu0
    %v541 = vadd.f32 0.0, %v540
    %v542 = vpop.f32.mrb[0].mxu0
    %543 = vdwg.mxu0
    %v545 = vsel %vm84, %v443, 0
    %547 = vmatprep.subr.mxu0 0.0
    %548 = vmatpush1.msra.mxu0 %v463
    %549 = vmatprep.subr.mxu0 0.0
    %550 = vmatpush1.msra.mxu0 %v464
    %551 = vmatprep.subr.mxu0 0.0
    %552 = vmatpush1.msra.mxu0 %v465
    %553 = vmatprep.subr.mxu0 0.0
    %554 = vmatpush1.msra.mxu0 %v466
    %555 = vmatprep.subr.mxu0 0.0
    %556 = vmatpush1.msra.mxu0 0.0
    %557 = vmatprep.subr.mxu0 0.0
    %558 = vmatpush1.msra.mxu0 0.0
    %559 = vmatprep.subr.mxu0 0.0
    %560 = vmatpush1.msra.mxu0 0.0
    %561 = vmatprep.subr.mxu0 0.0
    %562 = vmatpush1.msra.mxu0 0.0
    %563 = vmatprep.subr.mxu0 0.0
    %564 = vmatpush1.msra.mxu0 0.0
    %565 = vmatprep.subr.mxu0 0.0
    %566 = vmatpush1.msra.mxu0 0.0
    %567 = vmatprep.subr.mxu0 0.0
    %568 = vmatpush1.msra.mxu0 0.0
    %569 = vmatprep.subr.mxu0 0.0
    %570 = vmatpush1.msra.mxu0 0.0
    %571 = vmatprep.subr.mxu0 0.0
    %572 = vmatpush1.msra.mxu0 0.0
    %573 = vmatprep.subr.mxu0 0.0
    %574 = vmatpush1.msra.mxu0 0.0
    %575 = vmatprep.subr.mxu0 0.0
    %576 = vmatpush1.msra.mxu0 0.0
    %577 = vmatprep.subr.mxu0 0.0
    %578 = vmatpush1.msra.mxu0 0.0
    %579 = vmatprep.subr.mxu0 0.0
    %580 = vmatpush1.msra.mxu0 0.0
    %581 = vmatprep.subr.mxu0 0.0
    %582 = vmatpush1.msra.mxu0 0.0
    %583 = vmatprep.subr.mxu0 0.0
    %584 = vmatpush1.msra.mxu0 0.0
    %585 = vmatprep.subr.mxu0 0.0
    %586 = vmatpush1.msra.mxu0 0.0
    %587 = vmatprep.subr.mxu0 0.0
    %588 = vmatpush1.msra.mxu0 0.0
    %589 = vmatprep.subr.mxu0 0.0
    %590 = vmatpush1.msra.mxu0 0.0
    %591 = vmatprep.subr.mxu0 0.0
    %592 = vmatpush1.msra.mxu0 0.0
    %593 = vmatprep.subr.mxu0 0.0
    %594 = vmatpush1.msra.mxu0 0.0
    %595 = vmatprep.subr.mxu0 0.0
    %596 = vmatpush1.msra.mxu0 0.0
    %597 = vmatprep.subr.mxu0 0.0
    %598 = vmatpush1.msra.mxu0 0.0
    %599 = vmatprep.subr.mxu0 0.0
    %600 = vmatpush1.msra.mxu0 0.0
    %601 = vmatprep.subr.mxu0 0.0
    %602 = vmatpush1.msra.mxu0 0.0
    %603 = vmatprep.subr.mxu0 0.0
    %604 = vmatpush1.msra.mxu0 0.0
    %605 = vmatprep.subr.mxu0 0.0
    %606 = vmatpush1.msra.mxu0 0.0
    %607 = vmatprep.subr.mxu0 0.0
    %608 = vmatpush1.msra.mxu0 0.0
    %609 = vmatprep.subr.mxu0 0.0
    %610 = vmatpush1.msra.mxu0 0.0
    %611 = vmatprep.mubr.f32.mxu0 0.0
    %612 = vmatmul.mubr.f32.gmra.mrb[0].mxu0 %v545
    %v613 = vpop.f32.mrb[0].mxu0
    %v614 = vadd.f32 %v541, %v613
    %v615 = vpop.f32.mrb[0].mxu0
    %616 = vdwg.mxu0
    %s617 = scalar_lea.vmem %s3, 1
    %v618 = vld [vmem:[%s617] sm:$0x1]
    %v620 = vlaneseq
    %v621 = vshrl.u32 %v620, 7
    %v622 = vsub.s32 0, %v621
    %v623 = vrot.slane %v618, %v622
    %v625 = vadd.f32 %v614, %v623
    %v626 = vmax.f32 %v625, 0.0
    %s627 = scalar_lea.vmem %s4, 1
    %v628 = vld [vmem:[%s627] sm:$0x1]
    %v630 = vlaneseq
    %v631 = vshrl.u32 %v630, 7
    %v632 = vsub.s32 0, %v631
    %v633 = vrot.slane %v628, %v632
    %v635 = vmul.f32 %v626, %v633
    %636 = vadd.xlane.f32.xlu0 %v635
    %v637 = vpop.xlane.xlu0 %636
    %s638 = sld [smem:[#allocation10 + $0x1]]
    %v639 = vstv %s638
    %v640 = vadd.f32 %v637, %v639
    %v641 = vmax.f32 %v640, -10.0
    %v642 = vmin.f32 %v641, 10.0
    %v643 = vxor.u32 %v642, 2147483648
    %v644 = vmul.f32 %v643, 1.442695
    %v645 = vpow.pop %v644
    %v646 = vadd.f32 %v645, 1.0
    %v647 = vrcp.pop %v646
    %v648 = vmul.f32 1.0, %v647
    %v649 = vmul.f32 %v648, 1.99999
    %v650 = vadd.f32 %v649, 1e-05
    %v651 = vrcp.pop %v650
    %v652 = vmul.f32 %v650, %v651
    %v653 = vsub.f32 2.0, %v652
    %v654 = vmul.f32 %v651, %v653
    %v656 = vlaneseq
    %v657 = vshrl.u32 %v656, 7
    %v658 = vsub.s32 0, %v657
    %v659 = vrot.slane %v654, %v658
    %v660 = vlaneseq
    %v661 = vshrl.u32 %v660, 7
    %v662 = vsub.s32 1, %v661
    %v663 = vrot.slane %v654, %v662
    %v664 = vlaneseq
    %v665 = vshrl.u32 %v664, 7
    %v666 = vsub.s32 2, %v665
    %v667 = vrot.slane %v654, %v666
    %v668 = vlaneseq
    %v669 = vshrl.u32 %v668, 7
    %v670 = vsub.s32 3, %v669
    %v671 = vrot.slane %v654, %v670
    %v672 = vlaneseq
    %v673 = vshrl.u32 %v672, 7
    %v674 = vsub.s32 4, %v673
    %v675 = vrot.slane %v654, %v674
    %v676 = vlaneseq
    %v677 = vshrl.u32 %v676, 7
    %v678 = vsub.s32 5, %v677
    %v679 = vrot.slane %v654, %v678
    %v680 = vlaneseq
    %v681 = vshrl.u32 %v680, 7
    %v682 = vsub.s32 6, %v681
    %v683 = vrot.slane %v654, %v682
    %v684 = vlaneseq
    %v685 = vshrl.u32 %v684, 7
    %v686 = vsub.s32 7, %v685
    %v687 = vrot.slane %v654, %v686
    %v696 = vmul.f32 %v461, %v659
    %v697 = vmul.f32 %v461, %v663
    %v698 = vmul.f32 %v461, %v667
    %v699 = vmul.f32 %v461, %v671
    %v700 = vmul.f32 %v461, %v675
    %v701 = vmul.f32 %v461, %v679
    %v702 = vmul.f32 %v461, %v683
    %v703 = vmul.f32 %v461, %v687
    %712 = vset.pattern.permute.xlu0 0
    %713 = vperm.xlu0 %712, %v696
    %v714 = vpop.permute.xlu0 %713
    %715 = vset.pattern.permute.xlu0 0
    %716 = vperm.xlu0 %715, %v697
    %v717 = vpop.permute.xlu0 %716
    %718 = vset.pattern.permute.xlu0 0
    %719 = vperm.xlu0 %718, %v698
    %v720 = vpop.permute.xlu0 %719
    %721 = vset.pattern.permute.xlu0 0
    %722 = vperm.xlu0 %721, %v699
    %v723 = vpop.permute.xlu0 %722
    %724 = vset.pattern.permute.xlu0 0
    %725 = vperm.xlu0 %724, %v700
    %v726 = vpop.permute.xlu0 %725
    %727 = vset.pattern.permute.xlu0 0
    %728 = vperm.xlu0 %727, %v701
    %v729 = vpop.permute.xlu0 %728
    %730 = vset.pattern.permute.xlu0 0
    %731 = vperm.xlu0 %730, %v702
    %v732 = vpop.permute.xlu0 %731
    %733 = vset.pattern.permute.xlu0 0
    %734 = vperm.xlu0 %733, %v703
    %v735 = vpop.permute.xlu0 %734
    %v736 = vlaneseq
    %v737 = vshrl.u32 %v736, 7
    %v738 = vsub.s32 %v372, %v737
    %v739 = vrot.slane %v714, %v738
    %v740 = vlaneseq
    %v741 = vshrl.u32 %v740, 7
    %v742 = vsub.s32 %v372, %v741
    %v743 = vrot.slane %v717, %v742
    %v744 = vlaneseq
    %v745 = vshrl.u32 %v744, 7
    %v746 = vsub.s32 %v372, %v745
    %v747 = vrot.slane %v720, %v746
    %v748 = vlaneseq
    %v749 = vshrl.u32 %v748, 7
    %v750 = vsub.s32 %v372, %v749
    %v751 = vrot.slane %v723, %v750
    %v752 = vlaneseq
    %v753 = vshrl.u32 %v752, 7
    %v754 = vsub.s32 %v372, %v753
    %v755 = vrot.slane %v726, %v754
    %v756 = vlaneseq
    %v757 = vshrl.u32 %v756, 7
    %v758 = vsub.s32 %v372, %v757
    %v759 = vrot.slane %v729, %v758
    %v760 = vlaneseq
    %v761 = vshrl.u32 %v760, 7
    %v762 = vsub.s32 %v372, %v761
    %v763 = vrot.slane %v732, %v762
    %v764 = vlaneseq
    %v765 = vshrl.u32 %v764, 7
    %v766 = vsub.s32 %v372, %v765
    %v767 = vrot.slane %v735, %v766
    %v768 = vsel %vm405, %v743, %v739
    %v769 = vsel %vm407, %v747, %v768
    %v770 = vsel %vm409, %v751, %v769
    %v771 = vsel %vm411, %v755, %v770
    %v772 = vsel %vm413, %v759, %v771
    %v773 = vsel %vm415, %v763, %v772
    %v774 = vsel %vm417, %v767, %v773
    %s776 = scalar_lea.vmem [#allocation11], 8
    %777 = vst.msk [vmem:[%s776] sm:$0xff] %vm420, %v774
    %v778 = vlog2.pop %v650
    %v779 = vmul.f32 %v778, 0.6931472
    %v780 = vmul.f32 %v779, 4.0
    %v781 = vadd.f32 %v780, %v654
    %v782 = vsel %vm426, %v781, 0.0
    %783 = vadd.xlane.f32.xlu0 %v782
    %v784 = vpop.xlane.xlu0 %783
    %v785 = vrot.slane %v784, 4
    %v786 = vadd.f32 %v784, %v785
    %v787 = vrot.slane %v786, 2
    %v788 = vadd.f32 %v786, %v787
    %v789 = vrot.slane %v788, 1
    %v790 = vadd.f32 %v788, %v789
    %s791 = vtos %v790
    %v792 = vrcp.pop 8.0
    %s793 = vtos %v792
    %s794 = smul.f32 %s791, %s793
    %s795 = smul.f32 %s794, 0.1
    %s796 = sadd.f32 %s441, %s795
    %s797 = scalar_lea.vmem [#allocation2], 16
    %v798 = vld [vmem:[%s797] sm:$0xff]
    %s799 = scalar_lea.vmem [#allocation7], 16
    %v800 = vld [vmem:[%s799] sm:$0xff]
    %v801 = vmul.f32 %v798, %v800
    %v802 = vsel %vm84, %v801, 0.0
    %803 = vadd.xlane.f32.xlu0 %v802
    %v804 = vpop.xlane.xlu0 %803
    %v805 = vmul.f32 %v798, %v798
    %v806 = vsel %vm84, %v805, 0.0
    %807 = vadd.xlane.f32.xlu0 %v806
    %v808 = vpop.xlane.xlu0 %807
    %v809 = vmul.f32 %v800, %v800
    %v810 = vsel %vm84, %v809, 0.0
    %811 = vadd.xlane.f32.xlu0 %v810
    %v812 = vpop.xlane.xlu0 %811
    %v813 = vmul.f32 %v808, %v812
    %v814 = vmax.f32 %v813, 1e-16
    %v815 = vrsqrt.pop %v814
    %v816 = vmul.f32 %v804, %v815
    %s817 = scalar_lea.vmem [#allocation9], 128
    %v818 = vld [vmem:[%s817] sm:$0xff]
    %v819 = vld [vmem:[%s817 + $0x8] sm:$0xff]
    %v820 = vld [vmem:[%s817 + $0x10] sm:$0xff]
    %v821 = vld [vmem:[%s817 + $0x18] sm:$0xff]
    %v822 = vld [vmem:[%s817 + $0x20] sm:$0xff]
    %v823 = vld [vmem:[%s817 + $0x28] sm:$0xff]
    %v824 = vld [vmem:[%s817 + $0x30] sm:$0xff]
    %v825 = vld [vmem:[%s817 + $0x38] sm:$0xff]
    %v827 = vsel %vm84, %v800, 0
    %829 = vmatprep.subr.mxu0 0.0
    %830 = vmatpush1.msra.mxu0 %v822
    %831 = vmatprep.subr.mxu0 0.0
    %832 = vmatpush1.msra.mxu0 %v823
    %833 = vmatprep.subr.mxu0 0.0
    %834 = vmatpush1.msra.mxu0 %v824
    %835 = vmatprep.subr.mxu0 0.0
    %836 = vmatpush1.msra.mxu0 %v825
    %837 = vmatprep.subr.mxu0 0.0
    %838 = vmatpush1.msra.mxu0 0.0
    %839 = vmatprep.subr.mxu0 0.0
    %840 = vmatpush1.msra.mxu0 0.0
    %841 = vmatprep.subr.mxu0 0.0
    %842 = vmatpush1.msra.mxu0 0.0
    %843 = vmatprep.subr.mxu0 0.0
    %844 = vmatpush1.msra.mxu0 0.0
    %845 = vmatprep.subr.mxu0 0.0
    %846 = vmatpush1.msra.mxu0 0.0
    %847 = vmatprep.subr.mxu0 0.0
    %848 = vmatpush1.msra.mxu0 0.0
    %849 = vmatprep.subr.mxu0 0.0
    %850 = vmatpush1.msra.mxu0 0.0
    %851 = vmatprep.subr.mxu0 0.0
    %852 = vmatpush1.msra.mxu0 0.0
    %853 = vmatprep.subr.mxu0 0.0
    %854 = vmatpush1.msra.mxu0 0.0
    %855 = vmatprep.subr.mxu0 0.0
    %856 = vmatpush1.msra.mxu0 0.0
    %857 = vmatprep.subr.mxu0 0.0
    %858 = vmatpush1.msra.mxu0 0.0
    %859 = vmatprep.subr.mxu0 0.0
    %860 = vmatpush1.msra.mxu0 0.0
    %861 = vmatprep.subr.mxu0 0.0
    %862 = vmatpush1.msra.mxu0 0.0
    %863 = vmatprep.subr.mxu0 0.0
    %864 = vmatpush1.msra.mxu0 0.0
    %865 = vmatprep.subr.mxu0 0.0
    %866 = vmatpush1.msra.mxu0 0.0
    %867 = vmatprep.subr.mxu0 0.0
    %868 = vmatpush1.msra.mxu0 0.0
    %869 = vmatprep.subr.mxu0 0.0
    %870 = vmatpush1.msra.mxu0 0.0
    %871 = vmatprep.subr.mxu0 0.0
    %872 = vmatpush1.msra.mxu0 0.0
    %873 = vmatprep.subr.mxu0 0.0
    %874 = vmatpush1.msra.mxu0 0.0
    %875 = vmatprep.subr.mxu0 0.0
    %876 = vmatpush1.msra.mxu0 0.0
    %877 = vmatprep.subr.mxu0 0.0
    %878 = vmatpush1.msra.mxu0 0.0
    %879 = vmatprep.subr.mxu0 0.0
    %880 = vmatpush1.msra.mxu0 0.0
    %881 = vmatprep.subr.mxu0 0.0
    %882 = vmatpush1.msra.mxu0 0.0
    %883 = vmatprep.subr.mxu0 0.0
    %884 = vmatpush1.msra.mxu0 0.0
    %885 = vmatprep.subr.mxu0 0.0
    %886 = vmatpush1.msra.mxu0 0.0
    %887 = vmatprep.subr.mxu0 0.0
    %888 = vmatpush1.msra.mxu0 0.0
    %889 = vmatprep.subr.mxu0 0.0
    %890 = vmatpush1.msra.mxu0 0.0
    %891 = vmatprep.subr.mxu0 0.0
    %892 = vmatpush1.msra.mxu0 0.0
    %893 = vmatprep.mubr.f32.mxu0 0.0
    %894 = vmatmul.mubr.f32.gmra.mrb[0].mxu0 %v827
    %v895 = vpop.f32.mrb[0].mxu0
    %v896 = vadd.f32 0.0, %v895
    %v897 = vpop.f32.mrb[0].mxu0
    %898 = vdwg.mxu0
    %v900 = vsel %vm84, %v798, 0
    %902 = vmatprep.subr.mxu0 0.0
    %903 = vmatpush1.msra.mxu0 %v818
    %904 = vmatprep.subr.mxu0 0.0
    %905 = vmatpush1.msra.mxu0 %v819
    %906 = vmatprep.subr.mxu0 0.0
    %907 = vmatpush1.msra.mxu0 %v820
    %908 = vmatprep.subr.mxu0 0.0
    %909 = vmatpush1.msra.mxu0 %v821
    %910 = vmatprep.subr.mxu0 0.0
    %911 = vmatpush1.msra.mxu0 0.0
    %912 = vmatprep.subr.mxu0 0.0
    %913 = vmatpush1.msra.mxu0 0.0
    %914 = vmatprep.subr.mxu0 0.0
    %915 = vmatpush1.msra.mxu0 0.0
    %916 = vmatprep.subr.mxu0 0.0
    %917 = vmatpush1.msra.mxu0 0.0
    %918 = vmatprep.subr.mxu0 0.0
    %919 = vmatpush1.msra.mxu0 0.0
    %920 = vmatprep.subr.mxu0 0.0
    %921 = vmatpush1.msra.mxu0 0.0
    %922 = vmatprep.subr.mxu0 0.0
    %923 = vmatpush1.msra.mxu0 0.0
    %924 = vmatprep.subr.mxu0 0.0
    %925 = vmatpush1.msra.mxu0 0.0
    %926 = vmatprep.subr.mxu0 0.0
    %927 = vmatpush1.msra.mxu0 0.0
    %928 = vmatprep.subr.mxu0 0.0
    %929 = vmatpush1.msra.mxu0 0.0
    %930 = vmatprep.subr.mxu0 0.0
    %931 = vmatpush1.msra.mxu0 0.0
    %932 = vmatprep.subr.mxu0 0.0
    %933 = vmatpush1.msra.mxu0 0.0
    %934 = vmatprep.subr.mxu0 0.0
    %935 = vmatpush1.msra.mxu0 0.0
    %936 = vmatprep.subr.mxu0 0.0
    %937 = vmatpush1.msra.mxu0 0.0
    %938 = vmatprep.subr.mxu0 0.0
    %939 = vmatpush1.msra.mxu0 0.0
    %940 = vmatprep.subr.mxu0 0.0
    %941 = vmatpush1.msra.mxu0 0.0
    %942 = vmatprep.subr.mxu0 0.0
    %943 = vmatpush1.msra.mxu0 0.0
    %944 = vmatprep.subr.mxu0 0.0
    %945 = vmatpush1.msra.mxu0 0.0
    %946 = vmatprep.subr.mxu0 0.0
    %947 = vmatpush1.msra.mxu0 0.0
    %948 = vmatprep.subr.mxu0 0.0
    %949 = vmatpush1.msra.mxu0 0.0
    %950 = vmatprep.subr.mxu0 0.0
    %951 = vmatpush1.msra.mxu0 0.0
    %952 = vmatprep.subr.mxu0 0.0
    %953 = vmatpush1.msra.mxu0 0.0
    %954 = vmatprep.subr.mxu0 0.0
    %955 = vmatpush1.msra.mxu0 0.0
    %956 = vmatprep.subr.mxu0 0.0
    %957 = vmatpush1.msra.mxu0 0.0
    %958 = vmatprep.subr.mxu0 0.0
    %959 = vmatpush1.msra.mxu0 0.0
    %960 = vmatprep.subr.mxu0 0.0
    %961 = vmatpush1.msra.mxu0 0.0
    %962 = vmatprep.subr.mxu0 0.0
    %963 = vmatpush1.msra.mxu0 0.0
    %964 = vmatprep.subr.mxu0 0.0
    %965 = vmatpush1.msra.mxu0 0.0
    %966 = vmatprep.mubr.f32.mxu0 0.0
    %967 = vmatmul.mubr.f32.gmra.mrb[0].mxu0 %v900
    %v968 = vpop.f32.mrb[0].mxu0
    %v969 = vadd.f32 %v896, %v968
    %v970 = vpop.f32.mrb[0].mxu0
    %971 = vdwg.mxu0
    %s972 = scalar_lea.vmem %s3, 2
    %v973 = vld [vmem:[%s972] sm:$0x1]
    %v975 = vlaneseq
    %v976 = vshrl.u32 %v975, 7
    %v977 = vsub.s32 0, %v976
    %v978 = vrot.slane %v973, %v977
    %v980 = vadd.f32 %v969, %v978
    %v981 = vmax.f32 %v980, 0.0
    %s982 = scalar_lea.vmem %s4, 2
    %v983 = vld [vmem:[%s982] sm:$0x1]
    %v985 = vlaneseq
    %v986 = vshrl.u32 %v985, 7
    %v987 = vsub.s32 0, %v986
    %v988 = vrot.slane %v983, %v987
    %v990 = vmul.f32 %v981, %v988
    %991 = vadd.xlane.f32.xlu0 %v990
    %v992 = vpop.xlane.xlu0 %991
    %s993 = sld [smem:[#allocation10 + $0x2]]
    %v994 = vstv %s993
    %v995 = vadd.f32 %v992, %v994
    %v996 = vmax.f32 %v995, -10.0
    %v997 = vmin.f32 %v996, 10.0
    %v998 = vxor.u32 %v997, 2147483648
    %v999 = vmul.f32 %v998, 1.442695
    %v1000 = vpow.pop %v999
    %v1001 = vadd.f32 %v1000, 1.0
    %v1002 = vrcp.pop %v1001
    %v1003 = vmul.f32 1.0, %v1002
    %v1004 = vmul.f32 %v1003, 1.99999
    %v1005 = vadd.f32 %v1004, 1e-05
    %v1006 = vrcp.pop %v1005
    %v1007 = vmul.f32 %v1005, %v1006
    %v1008 = vsub.f32 2.0, %v1007
    %v1009 = vmul.f32 %v1006, %v1008
    %v1011 = vlaneseq
    %v1012 = vshrl.u32 %v1011, 7
    %v1013 = vsub.s32 0, %v1012
    %v1014 = vrot.slane %v1009, %v1013
    %v1015 = vlaneseq
    %v1016 = vshrl.u32 %v1015, 7
    %v1017 = vsub.s32 1, %v1016
    %v1018 = vrot.slane %v1009, %v1017
    %v1019 = vlaneseq
    %v1020 = vshrl.u32 %v1019, 7
    %v1021 = vsub.s32 2, %v1020
    %v1022 = vrot.slane %v1009, %v1021
    %v1023 = vlaneseq
    %v1024 = vshrl.u32 %v1023, 7
    %v1025 = vsub.s32 3, %v1024
    %v1026 = vrot.slane %v1009, %v1025
    %v1027 = vlaneseq
    %v1028 = vshrl.u32 %v1027, 7
    %v1029 = vsub.s32 4, %v1028
    %v1030 = vrot.slane %v1009, %v1029
    %v1031 = vlaneseq
    %v1032 = vshrl.u32 %v1031, 7
    %v1033 = vsub.s32 5, %v1032
    %v1034 = vrot.slane %v1009, %v1033
    %v1035 = vlaneseq
    %v1036 = vshrl.u32 %v1035, 7
    %v1037 = vsub.s32 6, %v1036
    %v1038 = vrot.slane %v1009, %v1037
    %v1039 = vlaneseq
    %v1040 = vshrl.u32 %v1039, 7
    %v1041 = vsub.s32 7, %v1040
    %v1042 = vrot.slane %v1009, %v1041
    %v1051 = vmul.f32 %v816, %v1014
    %v1052 = vmul.f32 %v816, %v1018
    %v1053 = vmul.f32 %v816, %v1022
    %v1054 = vmul.f32 %v816, %v1026
    %v1055 = vmul.f32 %v816, %v1030
    %v1056 = vmul.f32 %v816, %v1034
    %v1057 = vmul.f32 %v816, %v1038
    %v1058 = vmul.f32 %v816, %v1042
    %1067 = vset.pattern.permute.xlu0 0
    %1068 = vperm.xlu0 %1067, %v1051
    %v1069 = vpop.permute.xlu0 %1068
    %1070 = vset.pattern.permute.xlu0 0
    %1071 = vperm.xlu0 %1070, %v1052
    %v1072 = vpop.permute.xlu0 %1071
    %1073 = vset.pattern.permute.xlu0 0
    %1074 = vperm.xlu0 %1073, %v1053
    %v1075 = vpop.permute.xlu0 %1074
    %1076 = vset.pattern.permute.xlu0 0
    %1077 = vperm.xlu0 %1076, %v1054
    %v1078 = vpop.permute.xlu0 %1077
    %1079 = vset.pattern.permute.xlu0 0
    %1080 = vperm.xlu0 %1079, %v1055
    %v1081 = vpop.permute.xlu0 %1080
    %1082 = vset.pattern.permute.xlu0 0
    %1083 = vperm.xlu0 %1082, %v1056
    %v1084 = vpop.permute.xlu0 %1083
    %1085 = vset.pattern.permute.xlu0 0
    %1086 = vperm.xlu0 %1085, %v1057
    %v1087 = vpop.permute.xlu0 %1086
    %1088 = vset.pattern.permute.xlu0 0
    %1089 = vperm.xlu0 %1088, %v1058
    %v1090 = vpop.permute.xlu0 %1089
    %v1091 = vlaneseq
    %v1092 = vshrl.u32 %v1091, 7
    %v1093 = vsub.s32 %v372, %v1092
    %v1094 = vrot.slane %v1069, %v1093
    %v1095 = vlaneseq
    %v1096 = vshrl.u32 %v1095, 7
    %v1097 = vsub.s32 %v372, %v1096
    %v1098 = vrot.slane %v1072, %v1097
    %v1099 = vlaneseq
    %v1100 = vshrl.u32 %v1099, 7
    %v1101 = vsub.s32 %v372, %v1100
    %v1102 = vrot.slane %v1075, %v1101
    %v1103 = vlaneseq
    %v1104 = vshrl.u32 %v1103, 7
    %v1105 = vsub.s32 %v372, %v1104
    %v1106 = vrot.slane %v1078, %v1105
    %v1107 = vlaneseq
    %v1108 = vshrl.u32 %v1107, 7
    %v1109 = vsub.s32 %v372, %v1108
    %v1110 = vrot.slane %v1081, %v1109
    %v1111 = vlaneseq
    %v1112 = vshrl.u32 %v1111, 7
    %v1113 = vsub.s32 %v372, %v1112
    %v1114 = vrot.slane %v1084, %v1113
    %v1115 = vlaneseq
    %v1116 = vshrl.u32 %v1115, 7
    %v1117 = vsub.s32 %v372, %v1116
    %v1118 = vrot.slane %v1087, %v1117
    %v1119 = vlaneseq
    %v1120 = vshrl.u32 %v1119, 7
    %v1121 = vsub.s32 %v372, %v1120
    %v1122 = vrot.slane %v1090, %v1121
    %v1123 = vsel %vm405, %v1098, %v1094
    %v1124 = vsel %vm407, %v1102, %v1123
    %v1125 = vsel %vm409, %v1106, %v1124
    %v1126 = vsel %vm411, %v1110, %v1125
    %v1127 = vsel %vm413, %v1114, %v1126
    %v1128 = vsel %vm415, %v1118, %v1127
    %v1129 = vsel %vm417, %v1122, %v1128
    %s1131 = scalar_lea.vmem [#allocation11], 16
    %1132 = vst.msk [vmem:[%s1131] sm:$0xff] %vm420, %v1129
    %v1133 = vlog2.pop %v1005
    %v1134 = vmul.f32 %v1133, 0.6931472
    %v1135 = vmul.f32 %v1134, 4.0
    %v1136 = vadd.f32 %v1135, %v1009
    %v1137 = vsel %vm426, %v1136, 0.0
    %1138 = vadd.xlane.f32.xlu0 %v1137
    %v1139 = vpop.xlane.xlu0 %1138
    %v1140 = vrot.slane %v1139, 4
    %v1141 = vadd.f32 %v1139, %v1140
    %v1142 = vrot.slane %v1141, 2
    %v1143 = vadd.f32 %v1141, %v1142
    %v1144 = vrot.slane %v1143, 1
    %v1145 = vadd.f32 %v1143, %v1144
    %s1146 = vtos %v1145
    %v1147 = vrcp.pop 8.0
    %s1148 = vtos %v1147
    %s1149 = smul.f32 %s1146, %s1148
    %s1150 = smul.f32 %s1149, 0.1
    %s1151 = sadd.f32 %s796, %s1150
    %s1152 = scalar_lea.smem [#allocation12], 0
    %1153 = sst [smem:[%s1152]] %s1151
    // Predicated region
    $region42: #{tpu_custom_call.1} parent=1 // pred_check
      _
    $region43: #{tpu_custom_call.1} parent=1 // pred_check_branch
      %1155 = sbr.rel (0) target = $region45
    $region44: #{tpu_custom_call.1} parent=1 // pred_region
      %s1157 = ssub.s32 384, 384
      %1158 = vsyncadd [#allocation4], %s1157
      %s1159 = sshll.u32 [#allocation11], 4
      %s1160 = int_to_ptr.vmem [resolvable:$true] %s1159
      %1165 = dma.vmem_to_hbm [thread:$0]  %s1160, 384, %s6, [#allocation4], 128, 128, 8
    $region45: #{tpu_custom_call.1} parent=1 // pred_fallthru
      _
    // Predicated region
    $region46: #{tpu_custom_call.1} parent=1 // pred_check
      _
    $region47: #{tpu_custom_call.1} parent=1 // pred_check_branch
      %1167 = sbr.rel (0) target = $region49
    $region48: #{tpu_custom_call.1} parent=1 // pred_region
      %s1169 = ssub.s32 16, 16
      %1170 = vsyncadd [#allocation5], %s1169
      %1173 = dma.smem_to_hbm [#allocation12], 16, %s7, [#allocation5]
    $region49: #{tpu_custom_call.1} parent=1 // pred_fallthru
      _
    // Predicated region
    $region50: #{tpu_custom_call.1} parent=1 // pred_check
      _
    $region51: #{tpu_custom_call.1} parent=1 // pred_check_branch
      %1175 = sbr.rel (0) target = $region53
    $region52: #{tpu_custom_call.1} parent=1 // pred_region
      %1176 = dma.done [#allocation4], 384
    $region53: #{tpu_custom_call.1} parent=1 // pred_fallthru
      _
    // Predicated region
    $region54: #{tpu_custom_call.1} parent=1 // pred_check
      _
    $region55: #{tpu_custom_call.1} parent=1 // pred_check_branch
      %1178 = sbr.rel (0) target = $region57
    $region56: #{tpu_custom_call.1} parent=1 // pred_region
      %1179 = dma.done [#allocation5], 16
    $region57: #{tpu_custom_call.1} parent=1 // pred_fallthru
      _
    %1180 = sfence
    %1181 = vsyncpa [#allocation3], 1
    %1182 = vsyncpa [#allocation8], 1
    %1183 = vsyncpa [#allocation4], 1
    %1184 = vsyncpa [#allocation5], 1
    %1185 = vsyncpa [#allocation6], 1

</llo_original>
